<compile_context>
chip_gen: v7x
topology: tpu7x:2x2x1
jax: 0.10.0
libtpu: 0.0.40
codegen_flags: <defaults>
</compile_context>

<pallas_src>
from functools import partial

import jax
import jax.numpy as jnp
from jax.experimental import pallas as pl
from jax.experimental.pallas import tpu as pltpu

# -------- small-shape configuration (original: 768 / 12 / 12 / 5000) --------
D_MODEL = 128                 # multiple of 128 -> lane-dense activations/stores
NUM_HEADS = 4
NUM_LAYERS = 2
D_FF = 4 * D_MODEL
MAX_LEN = 64
HEAD_DIM = D_MODEL // NUM_HEADS
LN_EPS = 1e-5
NEG_INF = -1e30               # additive mask kept in f32 (bf16 would overflow)


# ------------------------------- fused kernel --------------------------------
def _layer_norm(h, gamma, beta):
    """Post-LN over the feature axis, f32 statistics."""
    mean = jnp.mean(h, axis=-1, keepdims=True)
    var = jnp.mean((h - mean) ** 2, axis=-1, keepdims=True)
    return (h - mean) * jax.lax.rsqrt(var + LN_EPS) * gamma + beta


def _decoder_stack_kernel(x_ref, pe_ref,
                          wqkv_ref, bqkv_ref, wo_ref, bo_ref,
                          wff1_ref, bff1_ref, wff2_ref, bff2_ref,
                          ln1g_ref, ln1b_ref, ln2g_ref, ln2b_ref,
                          out_ref, act_ref, mask_ref, *, seq, num_heads):
    """Grid = (batch, layer). One grid step = one decoder layer for one sequence;
    the (S, D) activation is carried across layers in VMEM scratch."""
    S, H = seq, num_heads
    D = act_ref.shape[-1]
    Dh = D // H
    scale = Dh ** -0.5

    layer = pl.program_id(1)

    # Layer 0 (per batch tile): init resident activation with x + PE and build
    # the additive causal bias once.
    @pl.when(layer == 0)
    def _init():
        act_ref[...] = (x_ref[...].astype(jnp.float32)
                        + pe_ref[...].astype(jnp.float32))
        row = jax.lax.broadcasted_iota(jnp.int32, (S, S), 0)
        col = jax.lax.broadcasted_iota(jnp.int32, (S, S), 1)
        mask_ref[...] = jnp.where(col <= row, 0.0, NEG_INF).astype(jnp.float32)

    x2 = act_ref[...]                                          # (S, D) f32

    # ---------------- causal multi-head self-attention ----------------
    qkv = jnp.dot(x2.astype(jnp.bfloat16), wqkv_ref[...],
                  preferred_element_type=jnp.float32) + bqkv_ref[...]     # (S, 3D)

    # Head-batched views (H, S, Dh): lane slices stacked on a leading batch dim.
    q = jnp.stack([qkv[:, h * Dh:(h + 1) * Dh] for h in range(H)], axis=0)
    k = jnp.stack([qkv[:, D + h * Dh:D + (h + 1) * Dh] for h in range(H)], axis=0)
    v = jnp.stack([qkv[:, 2 * D + h * Dh:2 * D + (h + 1) * Dh] for h in range(H)],
                  axis=0)

    # Single batched score einsum + one softmax for all heads (f32 stats).
    s = jnp.einsum('hqd,hkd->hqk', q.astype(jnp.bfloat16), k.astype(jnp.bfloat16),
                   preferred_element_type=jnp.float32) * scale            # (H,S,S)
    s = s + mask_ref[...]                          # additive causal bias (f32)
    s = s - jnp.max(s, axis=-1, keepdims=True)
    p = jnp.exp(s)
    # approx reciprocal runs on the EUP slot; ~1e-3 rel. error vs exact softmax.
    p = p * pl.reciprocal(jnp.sum(p, axis=-1, keepdims=True), approx=True)

    o = jnp.einsum('hqk,hkd->hqd', p.astype(jnp.bfloat16), v.astype(jnp.bfloat16),
                   preferred_element_type=jnp.float32)                    # (H,S,Dh)

    # Re-assemble heads on the lane axis and do ONE depth-D output projection.
    attn = jnp.concatenate([o[h] for h in range(H)], axis=-1)             # (S, D)
    proj = jnp.dot(attn.astype(jnp.bfloat16), wo_ref[...],
                   preferred_element_type=jnp.float32) + bo_ref[...]

    # residual add + LayerNorm 1 (post-LN)
    x2 = _layer_norm(x2 + proj, ln1g_ref[...], ln1b_ref[...])

    # ---------------- position-wise feed-forward (ReLU) ----------------
    hmid = jnp.dot(x2.astype(jnp.bfloat16), wff1_ref[...],
                   preferred_element_type=jnp.float32) + bff1_ref[...]
    hmid = jnp.maximum(hmid, 0.0)
    ff = jnp.dot(hmid.astype(jnp.bfloat16), wff2_ref[...],
                 preferred_element_type=jnp.float32) + bff2_ref[...]

    # residual add + LayerNorm 2 (post-LN)
    x2 = _layer_norm(x2 + ff, ln2g_ref[...], ln2b_ref[...])

    act_ref[...] = x2                                          # carry to next layer

    @pl.when(layer == pl.num_programs(1) - 1)
    def _finalize():
        out_ref[...] = x2.astype(out_ref.dtype)


# --------------------------- parameters / glue -------------------------------
def sinusoidal_pe(max_len, d_model, dtype=jnp.float32):
    pos = jnp.arange(max_len, dtype=jnp.float32)[:, None]
    div = jnp.exp(jnp.arange(0, d_model, 2, dtype=jnp.float32)
                  * (-jnp.log(jnp.float32(10000.0)) / d_model))
    pe = jnp.zeros((max_len, d_model), jnp.float32)
    pe = pe.at[:, 0::2].set(jnp.sin(pos * div))
    pe = pe.at[:, 1::2].set(jnp.cos(pos * div))
    return pe.astype(dtype)


def init_params(key):
    """Layer-stacked parameters (leading dim = NUM_LAYERS) for weight streaming.
    Weight matrices in bf16 (MXU-native, half the DMA bytes); biases/LN in f32."""
    k0, k1, k2, k3 = jax.random.split(key, 4)
    L, D, F = NUM_LAYERS, D_MODEL, D_FF
    wdt = jnp.bfloat16
    return {
        "pe":    sinusoidal_pe(MAX_LEN, D),
        "w_qkv": (0.02 * jax.random.normal(k0, (L, D, 3 * D), jnp.float32)).astype(wdt),
        "b_qkv": jnp.zeros((L, 1, 3 * D), jnp.float32),
        "w_o":   (0.02 * jax.random.normal(k1, (L, D, D), jnp.float32)).astype(wdt),
        "b_o":   jnp.zeros((L, 1, D), jnp.float32),
        "w_ff1": (0.02 * jax.random.normal(k2, (L, D, F), jnp.float32)).astype(wdt),
        "b_ff1": jnp.zeros((L, 1, F), jnp.float32),
        "w_ff2": (0.02 * jax.random.normal(k3, (L, F, D), jnp.float32)).astype(wdt),
        "b_ff2": jnp.zeros((L, 1, D), jnp.float32),
        "ln1_g": jnp.ones((L, 1, D), jnp.float32),
        "ln1_b": jnp.zeros((L, 1, D), jnp.float32),
        "ln2_g": jnp.ones((L, 1, D), jnp.float32),
        "ln2_b": jnp.zeros((L, 1, D), jnp.float32),
    }


def transformer_forward(x, params):
    B, S, D = x.shape
    pe = params["pe"][:S]                                       # (S, D)

    def per_layer(shape):
        # Stacked-weight spec: squeeze the layer dim, full block otherwise.
        n = len(shape)
        return pl.BlockSpec((None,) + shape, lambda b, l, _n=n: (l,) + (0,) * _n)

    in_specs = [
        pl.BlockSpec((None, S, D), lambda b, l: (b, 0, 0)),     # x: one sequence / tile
        pl.BlockSpec((S, D), lambda b, l: (0, 0)),              # positional encoding
        per_layer((D, 3 * D)),                                  # w_qkv
        per_layer((1, 3 * D)),                                  # b_qkv
        per_layer((D, D)),                                      # w_o
        per_layer((1, D)),                                      # b_o
        per_layer((D, D_FF)),                                   # w_ff1
        per_layer((1, D_FF)),                                   # b_ff1
        per_layer((D_FF, D)),                                   # w_ff2
        per_layer((1, D)),                                      # b_ff2
        per_layer((1, D)), per_layer((1, D)),                   # ln1_g, ln1_b
        per_layer((1, D)), per_layer((1, D)),                   # ln2_g, ln2_b
    ]

    out = pl.pallas_call(
        partial(_decoder_stack_kernel, seq=S, num_heads=NUM_HEADS),
        out_shape=jax.ShapeDtypeStruct((B, S, D), x.dtype),
        grid=(B, NUM_LAYERS),                                   # batch outer, layers inner
        in_specs=in_specs,
        out_specs=pl.BlockSpec((None, S, D), lambda b, l: (b, 0, 0)),
        scratch_shapes=[pltpu.VMEM((S, D), jnp.float32),        # activation carry
                        pltpu.VMEM((S, S), jnp.float32)],       # additive causal bias
        compiler_params=pltpu.CompilerParams(
            # layer axis is a sequential dependency; batch axis can be split
            # across TensorCores (v7x megacore).
            dimension_semantics=("parallel", "arbitrary"),
            # Safe everywhere at these toy shapes.  When scaling to D_MODEL=768:
            # raise toward ~100 MiB on v5e/v6e (128 MiB physical) and keep the
            # bf16 per-layer weight slab / FF K-tiling within ~48 MiB on v7x
            # (64 MiB physical VMEM).
            vmem_limit_bytes=32 * 1024 * 1024),
    )(x, pe,
      params["w_qkv"], params["b_qkv"], params["w_o"], params["b_o"],
      params["w_ff1"], params["b_ff1"], params["w_ff2"], params["b_ff2"],
      params["ln1_g"], params["ln1_b"], params["ln2_g"], params["ln2_b"])

    return out


# TODO(synk): dropout (identity in eval mode) and the argparse/registry module
# selection in the original spec are host-side configuration, not kernel ops.

if __name__ == "__main__":
    key = jax.random.PRNGKey(0)
    key, pkey, xkey = jax.random.split(key, 3)
    params = init_params(pkey)

    B, S = 2, 8
    x = jax.random.normal(xkey, (B, S, D_MODEL), jnp.float32)

    fwd = jax.jit(transformer_forward)
    out = fwd(x, params)
    out = jax.block_until_ready(out)

    assert out.shape == (B, S, D_MODEL)
    assert bool(jnp.all(jnp.isfinite(out)))
    print("KERNEL_OK")
</pallas_src>

<mosaic_0001>
module attributes {stable_mosaic.version = 11 : i64} {
  func.func @_decoder_stack_kernel(%arg0: i32, %arg1: i32, %arg2: memref<1x8x128xf32, #tpu.memory_space<vmem>>, %arg3: memref<8x128xf32, #tpu.memory_space<vmem>>, %arg4: memref<1x128x384xbf16, #tpu.memory_space<vmem>>, %arg5: memref<1x1x384xf32, #tpu.memory_space<vmem>>, %arg6: memref<1x128x128xbf16, #tpu.memory_space<vmem>>, %arg7: memref<1x1x128xf32, #tpu.memory_space<vmem>>, %arg8: memref<1x128x512xbf16, #tpu.memory_space<vmem>>, %arg9: memref<1x1x512xf32, #tpu.memory_space<vmem>>, %arg10: memref<1x512x128xbf16, #tpu.memory_space<vmem>>, %arg11: memref<1x1x128xf32, #tpu.memory_space<vmem>>, %arg12: memref<1x1x128xf32, #tpu.memory_space<vmem>>, %arg13: memref<1x1x128xf32, #tpu.memory_space<vmem>>, %arg14: memref<1x1x128xf32, #tpu.memory_space<vmem>>, %arg15: memref<1x1x128xf32, #tpu.memory_space<vmem>>, %arg16: memref<1x8x128xf32, #tpu.memory_space<vmem>>, %arg17: memref<8x128xf32, #tpu.memory_space<vmem>>, %arg18: memref<8x8xf32, #tpu.memory_space<vmem>>) attributes {dimension_semantics = [#tpu.dimension_semantics<parallel>, #tpu.dimension_semantics<arbitrary>], iteration_bounds = array<i64: 2, 2>, scalar_prefetch = 0 : i64, scratch_operands = 2 : i64, tpu.core_type = #tpu.core_type<tc>, window_params = [{transform_indices = @transform_0, window_bounds = array<i64: 1, 8, 128>}, {pipeline_mode = #tpu.pipeline_mode<synchronous>, transform_indices = @transform_1, window_bounds = array<i64: 8, 128>}, {transform_indices = @transform_2, window_bounds = array<i64: 1, 128, 384>}, {transform_indices = @transform_3, window_bounds = array<i64: 1, 1, 384>}, {transform_indices = @transform_4, window_bounds = array<i64: 1, 128, 128>}, {transform_indices = @transform_5, window_bounds = array<i64: 1, 1, 128>}, {transform_indices = @transform_6, window_bounds = array<i64: 1, 128, 512>}, {transform_indices = @transform_7, window_bounds = array<i64: 1, 1, 512>}, {transform_indices = @transform_8, window_bounds = array<i64: 1, 512, 128>}, {transform_indices = @transform_9, window_bounds = array<i64: 1, 1, 128>}, {transform_indices = @transform_10, window_bounds = array<i64: 1, 1, 128>}, {transform_indices = @transform_11, window_bounds = array<i64: 1, 1, 128>}, {transform_indices = @transform_12, window_bounds = array<i64: 1, 1, 128>}, {transform_indices = @transform_13, window_bounds = array<i64: 1, 1, 128>}, {transform_indices = @transform_14, window_bounds = array<i64: 1, 8, 128>}]} {
    %c0_i32 = arith.constant 0 : i32
    %0 = arith.cmpi eq, %arg1, %c0_i32 : i32
    %1 = arith.extui %0 : i1 to i32
    %c0_i32_0 = arith.constant 0 : i32
    %2 = arith.cmpi ne, %1, %c0_i32_0 : i32
    scf.if %2 {
      %c0_62 = arith.constant 0 : index
      %c0_63 = arith.constant 0 : index
      %c0_64 = arith.constant 0 : index
      %154 = vector.load %arg2[%c0_62, %c0_63, %c0_64] : memref<1x8x128xf32, #tpu.memory_space<vmem>>, vector<1x8x128xf32>
      %155 = vector.shape_cast %154 : vector<1x8x128xf32> to vector<8x128xf32>
      %c0_65 = arith.constant 0 : index
      %c0_66 = arith.constant 0 : index
      %156 = vector.load %arg3[%c0_65, %c0_66] : memref<8x128xf32, #tpu.memory_space<vmem>>, vector<8x128xf32>
      %157 = arith.addf %155, %156 : vector<8x128xf32>
      %c0_67 = arith.constant 0 : index
      %c0_68 = arith.constant 0 : index
      %158 = vector.load %arg17[%c0_67, %c0_68] : memref<8x128xf32, #tpu.memory_space<vmem>>, vector<8x128xf32>
      tpu.vector_store %arg17[%c0_67, %c0_68], %157 {strides = array<i32>} : memref<8x128xf32, #tpu.memory_space<vmem>>, vector<8x128xf32>,
      %159 = tpu.iota {dimensions = array<i32: 0>} : vector<8x8xi32>
      %160 = tpu.iota {dimensions = array<i32: 1>} : vector<8x8xi32>
      %161 = arith.cmpi sle, %160, %159 : vector<8x8xi32>
      %cst_69 = arith.constant 0.000000e+00 : f32
      %cst_70 = arith.constant -1.000000e+30 : f32
      %162 = vector.broadcast %cst_69 : f32 to vector<8x8xf32>
      %163 = vector.broadcast %cst_70 : f32 to vector<8x8xf32>
      %164 = arith.select %161, %162, %163 : vector<8x8xi1>, vector<8x8xf32>
      %c0_71 = arith.constant 0 : index
      %c0_72 = arith.constant 0 : index
      %165 = vector.load %arg18[%c0_71, %c0_72] : memref<8x8xf32, #tpu.memory_space<vmem>>, vector<8x8xf32>
      tpu.vector_store %arg18[%c0_71, %c0_72], %164 {strides = array<i32>} : memref<8x8xf32, #tpu.memory_space<vmem>>, vector<8x8xf32>,
    } else {
    }
    %c0 = arith.constant 0 : index
    %c0_1 = arith.constant 0 : index
    %3 = vector.load %arg17[%c0, %c0_1] : memref<8x128xf32, #tpu.memory_space<vmem>>, vector<8x128xf32>
    %4 = arith.truncf %3 : vector<8x128xf32> to vector<8x128xbf16>
    %c0_2 = arith.constant 0 : index
    %c0_3 = arith.constant 0 : index
    %c0_4 = arith.constant 0 : index
    %5 = vector.load %arg4[%c0_2, %c0_3, %c0_4] : memref<1x128x384xbf16, #tpu.memory_space<vmem>>, vector<1x128x384xbf16>
    %6 = vector.shape_cast %5 : vector<1x128x384xbf16> to vector<128x384xbf16>
    %cst = arith.constant dense<0.000000e+00> : vector<8x384xf32>
    %7 = tpu.matmul %4, %6, %cst {dimension_numbers = #tpu.dot_dimension_numbers<[1], [0], [0], [1], [0, 0, 1, 1], [], []>} : vector<8x128xbf16>, vector<128x384xbf16>, vector<8x384xf32> -> vector<8x384xf32>
    %c0_5 = arith.constant 0 : index
    %c0_6 = arith.constant 0 : index
    %c0_7 = arith.constant 0 : index
    %8 = vector.load %arg5[%c0_5, %c0_6, %c0_7] : memref<1x1x384xf32, #tpu.memory_space<vmem>>, vector<1x1x384xf32>
    %9 = vector.shape_cast %8 : vector<1x1x384xf32> to vector<1x384xf32>
    %10 = vector.broadcast %9 : vector<1x384xf32> to vector<8x384xf32>
    %11 = arith.addf %7, %10 : vector<8x384xf32>
    %12 = vector.extract_strided_slice %11 {offsets = [0, 0], sizes = [8, 32], strides = [1, 1]} : vector<8x384xf32> to vector<8x32xf32>
    %13 = vector.extract_strided_slice %11 {offsets = [0, 32], sizes = [8, 32], strides = [1, 1]} : vector<8x384xf32> to vector<8x32xf32>
    %14 = vector.extract_strided_slice %11 {offsets = [0, 64], sizes = [8, 32], strides = [1, 1]} : vector<8x384xf32> to vector<8x32xf32>
    %15 = vector.extract_strided_slice %11 {offsets = [0, 96], sizes = [8, 32], strides = [1, 1]} : vector<8x384xf32> to vector<8x32xf32>
    %16 = vector.shape_cast %12 : vector<8x32xf32> to vector<1x8x32xf32>
    %17 = vector.shape_cast %13 : vector<8x32xf32> to vector<1x8x32xf32>
    %18 = vector.shape_cast %14 : vector<8x32xf32> to vector<1x8x32xf32>
    %19 = vector.shape_cast %15 : vector<8x32xf32> to vector<1x8x32xf32>
    %20 = tpu.concatenate %16, %17, %18, %19 in 0 : vector<1x8x32xf32>, vector<1x8x32xf32>, vector<1x8x32xf32>, vector<1x8x32xf32> -> vector<4x8x32xf32>
    %21 = vector.extract_strided_slice %11 {offsets = [0, 128], sizes = [8, 32], strides = [1, 1]} : vector<8x384xf32> to vector<8x32xf32>
    %22 = vector.extract_strided_slice %11 {offsets = [0, 160], sizes = [8, 32], strides = [1, 1]} : vector<8x384xf32> to vector<8x32xf32>
    %23 = vector.extract_strided_slice %11 {offsets = [0, 192], sizes = [8, 32], strides = [1, 1]} : vector<8x384xf32> to vector<8x32xf32>
    %24 = vector.extract_strided_slice %11 {offsets = [0, 224], sizes = [8, 32], strides = [1, 1]} : vector<8x384xf32> to vector<8x32xf32>
    %25 = vector.shape_cast %21 : vector<8x32xf32> to vector<1x8x32xf32>
    %26 = vector.shape_cast %22 : vector<8x32xf32> to vector<1x8x32xf32>
    %27 = vector.shape_cast %23 : vector<8x32xf32> to vector<1x8x32xf32>
    %28 = vector.shape_cast %24 : vector<8x32xf32> to vector<1x8x32xf32>
    %29 = tpu.concatenate %25, %26, %27, %28 in 0 : vector<1x8x32xf32>, vector<1x8x32xf32>, vector<1x8x32xf32>, vector<1x8x32xf32> -> vector<4x8x32xf32>
    %30 = vector.extract_strided_slice %11 {offsets = [0, 256], sizes = [8, 32], strides = [1, 1]} : vector<8x384xf32> to vector<8x32xf32>
    %31 = vector.extract_strided_slice %11 {offsets = [0, 288], sizes = [8, 32], strides = [1, 1]} : vector<8x384xf32> to vector<8x32xf32>
    %32 = vector.extract_strided_slice %11 {offsets = [0, 320], sizes = [8, 32], strides = [1, 1]} : vector<8x384xf32> to vector<8x32xf32>
    %33 = vector.extract_strided_slice %11 {offsets = [0, 352], sizes = [8, 32], strides = [1, 1]} : vector<8x384xf32> to vector<8x32xf32>
    %34 = vector.shape_cast %30 : vector<8x32xf32> to vector<1x8x32xf32>
    %35 = vector.shape_cast %31 : vector<8x32xf32> to vector<1x8x32xf32>
    %36 = vector.shape_cast %32 : vector<8x32xf32> to vector<1x8x32xf32>
    %37 = vector.shape_cast %33 : vector<8x32xf32> to vector<1x8x32xf32>
    %38 = tpu.concatenate %34, %35, %36, %37 in 0 : vector<1x8x32xf32>, vector<1x8x32xf32>, vector<1x8x32xf32>, vector<1x8x32xf32> -> vector<4x8x32xf32>
    %39 = arith.truncf %20 : vector<4x8x32xf32> to vector<4x8x32xbf16>
    %40 = arith.truncf %29 : vector<4x8x32xf32> to vector<4x8x32xbf16>
    "tpu.trace_start"() <{level = 10 : i32, message = "hqd,hkd->hqk"}> : () -> ()
    %cst_8 = arith.constant dense<0.000000e+00> : vector<4x8x8xf32>
    %41 = tpu.matmul %39, %40, %cst_8 {dimension_numbers = #tpu.dot_dimension_numbers<[2], [2], [1], [1], [0, 0, 0, 1, 1, 1], [0], [0]>} : vector<4x8x32xbf16>, vector<4x8x32xbf16>, vector<4x8x8xf32> -> vector<4x8x8xf32>
    "tpu.trace_stop"() : () -> ()
    %cst_9 = arith.constant 0.176776692 : f32
    %42 = vector.broadcast %cst_9 : f32 to vector<4x8x8xf32>
    %43 = arith.mulf %41, %42 : vector<4x8x8xf32>
    %c0_10 = arith.constant 0 : index
    %c0_11 = arith.constant 0 : index
    %44 = vector.load %arg18[%c0_10, %c0_11] : memref<8x8xf32, #tpu.memory_space<vmem>>, vector<8x8xf32>
    %45 = vector.shape_cast %44 : vector<8x8xf32> to vector<1x8x8xf32>
    %46 = vector.broadcast %45 : vector<1x8x8xf32> to vector<4x8x8xf32>
    %47 = arith.addf %43, %46 : vector<4x8x8xf32>
    %cst_12 = arith.constant dense<0xFF800000> : vector<4x8xf32>
    %48 = vector.multi_reduction <maximumf>, %47, %cst_12 [2] : vector<4x8x8xf32> to vector<4x8xf32>
    %49 = vector.shape_cast %48 : vector<4x8xf32> to vector<4x8x1xf32>
    %50 = vector.broadcast %49 : vector<4x8x1xf32> to vector<4x8x8xf32>
    %51 = arith.subf %47, %50 : vector<4x8x8xf32>
    %52 = math.exp %51 : vector<4x8x8xf32>
    %cst_13 = arith.constant dense<0.000000e+00> : vector<4x8xf32>
    %53 = vector.multi_reduction <add>, %52, %cst_13 [2] : vector<4x8x8xf32> to vector<4x8xf32>
    %54 = vector.shape_cast %53 : vector<4x8xf32> to vector<4x8x1xf32>
    %55 = tpu.reciprocal %54 {approx = true} : vector<4x8x1xf32> -> vector<4x8x1xf32>
    %56 = vector.broadcast %55 : vector<4x8x1xf32> to vector<4x8x8xf32>
    %57 = arith.mulf %52, %56 : vector<4x8x8xf32>
    %58 = arith.truncf %57 : vector<4x8x8xf32> to vector<4x8x8xbf16>
    %59 = arith.truncf %38 : vector<4x8x32xf32> to vector<4x8x32xbf16>
    "tpu.trace_start"() <{level = 10 : i32, message = "hqk,hkd->hqd"}> : () -> ()
    %cst_14 = arith.constant dense<0.000000e+00> : vector<4x8x32xf32>
    %60 = tpu.matmul %58, %59, %cst_14 {dimension_numbers = #tpu.dot_dimension_numbers<[2], [1], [1], [2], [0, 0, 0, 1, 1, 2], [0], [0]>} : vector<4x8x8xbf16>, vector<4x8x32xbf16>, vector<4x8x32xf32> -> vector<4x8x32xf32>
    "tpu.trace_stop"() : () -> ()
    %61 = vector.extract_strided_slice %60 {offsets = [0, 0, 0], sizes = [1, 8, 32], strides = [1, 1, 1]} : vector<4x8x32xf32> to vector<1x8x32xf32>
    %62 = vector.shape_cast %61 : vector<1x8x32xf32> to vector<8x32xf32>
    %63 = vector.extract_strided_slice %60 {offsets = [1, 0, 0], sizes = [1, 8, 32], strides = [1, 1, 1]} : vector<4x8x32xf32> to vector<1x8x32xf32>
    %64 = vector.shape_cast %63 : vector<1x8x32xf32> to vector<8x32xf32>
    %65 = vector.extract_strided_slice %60 {offsets = [2, 0, 0], sizes = [1, 8, 32], strides = [1, 1, 1]} : vector<4x8x32xf32> to vector<1x8x32xf32>
    %66 = vector.shape_cast %65 : vector<1x8x32xf32> to vector<8x32xf32>
    %67 = vector.extract_strided_slice %60 {offsets = [3, 0, 0], sizes = [1, 8, 32], strides = [1, 1, 1]} : vector<4x8x32xf32> to vector<1x8x32xf32>
    %68 = vector.shape_cast %67 : vector<1x8x32xf32> to vector<8x32xf32>
    %69 = tpu.concatenate %62, %64, %66, %68 in 1 : vector<8x32xf32>, vector<8x32xf32>, vector<8x32xf32>, vector<8x32xf32> -> vector<8x128xf32>
    %70 = arith.truncf %69 : vector<8x128xf32> to vector<8x128xbf16>
    %c0_15 = arith.constant 0 : index
    %c0_16 = arith.constant 0 : index
    %c0_17 = arith.constant 0 : index
    %71 = vector.load %arg6[%c0_15, %c0_16, %c0_17] : memref<1x128x128xbf16, #tpu.memory_space<vmem>>, vector<1x128x128xbf16>
    %72 = vector.shape_cast %71 : vector<1x128x128xbf16> to vector<128x128xbf16>
    %cst_18 = arith.constant dense<0.000000e+00> : vector<8x128xf32>
    %73 = tpu.matmul %70, %72, %cst_18 {dimension_numbers = #tpu.dot_dimension_numbers<[1], [0], [0], [1], [0, 0, 1, 1], [], []>} : vector<8x128xbf16>, vector<128x128xbf16>, vector<8x128xf32> -> vector<8x128xf32>
    %c0_19 = arith.constant 0 : index
    %c0_20 = arith.constant 0 : index
    %c0_21 = arith.constant 0 : index
    %74 = vector.load %arg7[%c0_19, %c0_20, %c0_21] : memref<1x1x128xf32, #tpu.memory_space<vmem>>, vector<1x1x128xf32>
    %75 = vector.shape_cast %74 : vector<1x1x128xf32> to vector<1x128xf32>
    %76 = vector.broadcast %75 : vector<1x128xf32> to vector<8x128xf32>
    %77 = arith.addf %73, %76 : vector<8x128xf32>
    %78 = arith.addf %3, %77 : vector<8x128xf32>
    %c0_22 = arith.constant 0 : index
    %c0_23 = arith.constant 0 : index
    %c0_24 = arith.constant 0 : index
    %79 = vector.load %arg12[%c0_22, %c0_23, %c0_24] : memref<1x1x128xf32, #tpu.memory_space<vmem>>, vector<1x1x128xf32>
    %80 = vector.shape_cast %79 : vector<1x1x128xf32> to vector<1x128xf32>
    %c0_25 = arith.constant 0 : index
    %c0_26 = arith.constant 0 : index
    %c0_27 = arith.constant 0 : index
    %81 = vector.load %arg13[%c0_25, %c0_26, %c0_27] : memref<1x1x128xf32, #tpu.memory_space<vmem>>, vector<1x1x128xf32>
    %82 = vector.shape_cast %81 : vector<1x1x128xf32> to vector<1x128xf32>
    %cst_28 = arith.constant dense<0.000000e+00> : vector<8xf32>
    %83 = vector.multi_reduction <add>, %78, %cst_28 [1] : vector<8x128xf32> to vector<8xf32>
    %84 = vector.shape_cast %83 : vector<8xf32> to vector<8x1xf32>
    %cst_29 = arith.constant 1.280000e+02 : f32
    %85 = vector.broadcast %cst_29 : f32 to vector<8x1xf32>
    %86 = arith.divf %84, %85 : vector<8x1xf32>
    %87 = vector.broadcast %86 : vector<8x1xf32> to vector<8x128xf32>
    %88 = arith.subf %78, %87 : vector<8x128xf32>
    %89 = arith.mulf %88, %88 : vector<8x128xf32>
    %cst_30 = arith.constant dense<0.000000e+00> : vector<8xf32>
    %90 = vector.multi_reduction <add>, %89, %cst_30 [1] : vector<8x128xf32> to vector<8xf32>
    %91 = vector.shape_cast %90 : vector<8xf32> to vector<8x1xf32>
    %cst_31 = arith.constant 1.280000e+02 : f32
    %92 = vector.broadcast %cst_31 : f32 to vector<8x1xf32>
    %93 = arith.divf %91, %92 : vector<8x1xf32>
    %94 = vector.broadcast %86 : vector<8x1xf32> to vector<8x128xf32>
    %95 = arith.subf %78, %94 : vector<8x128xf32>
    %cst_32 = arith.constant 9.99999974E-6 : f32
    %96 = vector.broadcast %cst_32 : f32 to vector<8x1xf32>
    %97 = arith.addf %93, %96 : vector<8x1xf32>
    %98 = math.rsqrt %97 : vector<8x1xf32>
    %99 = vector.broadcast %98 : vector<8x1xf32> to vector<8x128xf32>
    %100 = arith.mulf %95, %99 : vector<8x128xf32>
    %101 = vector.broadcast %80 : vector<1x128xf32> to vector<8x128xf32>
    %102 = arith.mulf %100, %101 : vector<8x128xf32>
    %103 = vector.broadcast %82 : vector<1x128xf32> to vector<8x128xf32>
    %104 = arith.addf %102, %103 : vector<8x128xf32>
    %105 = arith.truncf %104 : vector<8x128xf32> to vector<8x128xbf16>
    %c0_33 = arith.constant 0 : index
    %c0_34 = arith.constant 0 : index
    %c0_35 = arith.constant 0 : index
    %106 = vector.load %arg8[%c0_33, %c0_34, %c0_35] : memref<1x128x512xbf16, #tpu.memory_space<vmem>>, vector<1x128x512xbf16>
    %107 = vector.shape_cast %106 : vector<1x128x512xbf16> to vector<128x512xbf16>
    %cst_36 = arith.constant dense<0.000000e+00> : vector<8x512xf32>
    %108 = tpu.matmul %105, %107, %cst_36 {dimension_numbers = #tpu.dot_dimension_numbers<[1], [0], [0], [1], [0, 0, 1, 1], [], []>} : vector<8x128xbf16>, vector<128x512xbf16>, vector<8x512xf32> -> vector<8x512xf32>
    %c0_37 = arith.constant 0 : index
    %c0_38 = arith.constant 0 : index
    %c0_39 = arith.constant 0 : index
    %109 = vector.load %arg9[%c0_37, %c0_38, %c0_39] : memref<1x1x512xf32, #tpu.memory_space<vmem>>, vector<1x1x512xf32>
    %110 = vector.shape_cast %109 : vector<1x1x512xf32> to vector<1x512xf32>
    %111 = vector.broadcast %110 : vector<1x512xf32> to vector<8x512xf32>
    %112 = arith.addf %108, %111 : vector<8x512xf32>
    %cst_40 = arith.constant 0.000000e+00 : f32
    %113 = vector.broadcast %cst_40 : f32 to vector<8x512xf32>
    %114 = arith.maximumf %112, %113 : vector<8x512xf32>
    %115 = arith.truncf %114 : vector<8x512xf32> to vector<8x512xbf16>
    %c0_41 = arith.constant 0 : index
    %c0_42 = arith.constant 0 : index
    %c0_43 = arith.constant 0 : index
    %116 = vector.load %arg10[%c0_41, %c0_42, %c0_43] : memref<1x512x128xbf16, #tpu.memory_space<vmem>>, vector<1x512x128xbf16>
    %117 = vector.shape_cast %116 : vector<1x512x128xbf16> to vector<512x128xbf16>
    %cst_44 = arith.constant dense<0.000000e+00> : vector<8x128xf32>
    %118 = tpu.matmul %115, %117, %cst_44 {dimension_numbers = #tpu.dot_dimension_numbers<[1], [0], [0], [1], [0, 0, 1, 1], [], []>} : vector<8x512xbf16>, vector<512x128xbf16>, vector<8x128xf32> -> vector<8x128xf32>
    %c0_45 = arith.constant 0 : index
    %c0_46 = arith.constant 0 : index
    %c0_47 = arith.constant 0 : index
    %119 = vector.load %arg11[%c0_45, %c0_46, %c0_47] : memref<1x1x128xf32, #tpu.memory_space<vmem>>, vector<1x1x128xf32>
    %120 = vector.shape_cast %119 : vector<1x1x128xf32> to vector<1x128xf32>
    %121 = vector.broadcast %120 : vector<1x128xf32> to vector<8x128xf32>
    %122 = arith.addf %118, %121 : vector<8x128xf32>
    %123 = arith.addf %104, %122 : vector<8x128xf32>
    %c0_48 = arith.constant 0 : index
    %c0_49 = arith.constant 0 : index
    %c0_50 = arith.constant 0 : index
    %124 = vector.load %arg14[%c0_48, %c0_49, %c0_50] : memref<1x1x128xf32, #tpu.memory_space<vmem>>, vector<1x1x128xf32>
    %125 = vector.shape_cast %124 : vector<1x1x128xf32> to vector<1x128xf32>
    %c0_51 = arith.constant 0 : index
    %c0_52 = arith.constant 0 : index
    %c0_53 = arith.constant 0 : index
    %126 = vector.load %arg15[%c0_51, %c0_52, %c0_53] : memref<1x1x128xf32, #tpu.memory_space<vmem>>, vector<1x1x128xf32>
    %127 = vector.shape_cast %126 : vector<1x1x128xf32> to vector<1x128xf32>
    %cst_54 = arith.constant dense<0.000000e+00> : vector<8xf32>
    %128 = vector.multi_reduction <add>, %123, %cst_54 [1] : vector<8x128xf32> to vector<8xf32>
    %129 = vector.shape_cast %128 : vector<8xf32> to vector<8x1xf32>
    %cst_55 = arith.constant 1.280000e+02 : f32
    %130 = vector.broadcast %cst_55 : f32 to vector<8x1xf32>
    %131 = arith.divf %129, %130 : vector<8x1xf32>
    %132 = vector.broadcast %131 : vector<8x1xf32> to vector<8x128xf32>
    %133 = arith.subf %123, %132 : vector<8x128xf32>
    %134 = arith.mulf %133, %133 : vector<8x128xf32>
    %cst_56 = arith.constant dense<0.000000e+00> : vector<8xf32>
    %135 = vector.multi_reduction <add>, %134, %cst_56 [1] : vector<8x128xf32> to vector<8xf32>
    %136 = vector.shape_cast %135 : vector<8xf32> to vector<8x1xf32>
    %cst_57 = arith.constant 1.280000e+02 : f32
    %137 = vector.broadcast %cst_57 : f32 to vector<8x1xf32>
    %138 = arith.divf %136, %137 : vector<8x1xf32>
    %139 = vector.broadcast %131 : vector<8x1xf32> to vector<8x128xf32>
    %140 = arith.subf %123, %139 : vector<8x128xf32>
    %cst_58 = arith.constant 9.99999974E-6 : f32
    %141 = vector.broadcast %cst_58 : f32 to vector<8x1xf32>
    %142 = arith.addf %138, %141 : vector<8x1xf32>
    %143 = math.rsqrt %142 : vector<8x1xf32>
    %144 = vector.broadcast %143 : vector<8x1xf32> to vector<8x128xf32>
    %145 = arith.mulf %140, %144 : vector<8x128xf32>
    %146 = vector.broadcast %125 : vector<1x128xf32> to vector<8x128xf32>
    %147 = arith.mulf %145, %146 : vector<8x128xf32>
    %148 = vector.broadcast %127 : vector<1x128xf32> to vector<8x128xf32>
    %149 = arith.addf %147, %148 : vector<8x128xf32>
    %c0_59 = arith.constant 0 : index
    %c0_60 = arith.constant 0 : index
    %150 = vector.load %arg17[%c0_59, %c0_60] : memref<8x128xf32, #tpu.memory_space<vmem>>, vector<8x128xf32>
    tpu.vector_store %arg17[%c0_59, %c0_60], %149 {strides = array<i32>} : memref<8x128xf32, #tpu.memory_space<vmem>>, vector<8x128xf32>,
    %c1_i32 = arith.constant 1 : i32
    %151 = arith.cmpi eq, %arg1, %c1_i32 : i32
    %152 = arith.extui %151 : i1 to i32
    %c0_i32_61 = arith.constant 0 : i32
    %153 = arith.cmpi ne, %152, %c0_i32_61 : i32
    scf.if %153 {
      %c0_62 = arith.constant 0 : index
      %c0_63 = arith.constant 0 : index
      %c0_64 = arith.constant 0 : index
      %154 = vector.load %arg16[%c0_62, %c0_63, %c0_64] : memref<1x8x128xf32, #tpu.memory_space<vmem>>, vector<1x8x128xf32>
      %155 = vector.shape_cast %154 : vector<1x8x128xf32> to vector<8x128xf32>
      %156 = vector.shape_cast %149 : vector<8x128xf32> to vector<1x8x128xf32>
      tpu.vector_store %arg16[%c0_62, %c0_63, %c0_64], %156 {strides = array<i32>} : memref<1x8x128xf32, #tpu.memory_space<vmem>>, vector<1x8x128xf32>,
    } else {
    }
    return
  }
  func.func @transform_0(%arg0: i32, %arg1: i32) -> (i32, i32, i32) {
    %c0_i32 = arith.constant 0 : i32
    %c0_i32_0 = arith.constant 0 : i32
    %c0_i32_1 = arith.constant 0 : i32
    return %arg0, %c0_i32, %c0_i32_0 : i32, i32, i32
  }
  func.func @transform_1(%arg0: i32, %arg1: i32) -> (i32, i32) {
    %c0_i32 = arith.constant 0 : i32
    %c0_i32_0 = arith.constant 0 : i32
    %c0_i32_1 = arith.constant 0 : i32
    return %c0_i32, %c0_i32_0 : i32, i32
  }
  func.func @transform_2(%arg0: i32, %arg1: i32) -> (i32, i32, i32) {
    %c0_i32 = arith.constant 0 : i32
    %c0_i32_0 = arith.constant 0 : i32
    %c0_i32_1 = arith.constant 0 : i32
    return %arg1, %c0_i32, %c0_i32_0 : i32, i32, i32
  }
  func.func @transform_3(%arg0: i32, %arg1: i32) -> (i32, i32, i32) {
    %c0_i32 = arith.constant 0 : i32
    %c0_i32_0 = arith.constant 0 : i32
    %c0_i32_1 = arith.constant 0 : i32
    return %arg1, %c0_i32, %c0_i32_0 : i32, i32, i32
  }
  func.func @transform_4(%arg0: i32, %arg1: i32) -> (i32, i32, i32) {
    %c0_i32 = arith.constant 0 : i32
    %c0_i32_0 = arith.constant 0 : i32
    %c0_i32_1 = arith.constant 0 : i32
    return %arg1, %c0_i32, %c0_i32_0 : i32, i32, i32
  }
  func.func @transform_5(%arg0: i32, %arg1: i32) -> (i32, i32, i32) {
    %c0_i32 = arith.constant 0 : i32
    %c0_i32_0 = arith.constant 0 : i32
    %c0_i32_1 = arith.constant 0 : i32
    return %arg1, %c0_i32, %c0_i32_0 : i32, i32, i32
  }
  func.func @transform_6(%arg0: i32, %arg1: i32) -> (i32, i32, i32) {
    %c0_i32 = arith.constant 0 : i32
    %c0_i32_0 = arith.constant 0 : i32
    %c0_i32_1 = arith.constant 0 : i32
    return %arg1, %c0_i32, %c0_i32_0 : i32, i32, i32
  }
  func.func @transform_7(%arg0: i32, %arg1: i32) -> (i32, i32, i32) {
    %c0_i32 = arith.constant 0 : i32
    %c0_i32_0 = arith.constant 0 : i32
    %c0_i32_1 = arith.constant 0 : i32
    return %arg1, %c0_i32, %c0_i32_0 : i32, i32, i32
  }
  func.func @transform_8(%arg0: i32, %arg1: i32) -> (i32, i32, i32) {
    %c0_i32 = arith.constant 0 : i32
    %c0_i32_0 = arith.constant 0 : i32
    %c0_i32_1 = arith.constant 0 : i32
    return %arg1, %c0_i32, %c0_i32_0 : i32, i32, i32
  }
  func.func @transform_9(%arg0: i32, %arg1: i32) -> (i32, i32, i32) {
    %c0_i32 = arith.constant 0 : i32
    %c0_i32_0 = arith.constant 0 : i32
    %c0_i32_1 = arith.constant 0 : i32
    return %arg1, %c0_i32, %c0_i32_0 : i32, i32, i32
  }
  func.func @transform_10(%arg0: i32, %arg1: i32) -> (i32, i32, i32) {
    %c0_i32 = arith.constant 0 : i32
    %c0_i32_0 = arith.constant 0 : i32
    %c0_i32_1 = arith.constant 0 : i32
    return %arg1, %c0_i32, %c0_i32_0 : i32, i32, i32
  }
  func.func @transform_11(%arg0: i32, %arg1: i32) -> (i32, i32, i32) {
    %c0_i32 = arith.constant 0 : i32
    %c0_i32_0 = arith.constant 0 : i32
    %c0_i32_1 = arith.constant 0 : i32
    return %arg1, %c0_i32, %c0_i32_0 : i32, i32, i32
  }
  func.func @transform_12(%arg0: i32, %arg1: i32) -> (i32, i32, i32) {
    %c0_i32 = arith.constant 0 : i32
    %c0_i32_0 = arith.constant 0 : i32
    %c0_i32_1 = arith.constant 0 : i32
    return %arg1, %c0_i32, %c0_i32_0 : i32, i32, i32
  }
  func.func @transform_13(%arg0: i32, %arg1: i32) -> (i32, i32, i32) {
    %c0_i32 = arith.constant 0 : i32
    %c0_i32_0 = arith.constant 0 : i32
    %c0_i32_1 = arith.constant 0 : i32
    return %arg1, %c0_i32, %c0_i32_0 : i32, i32, i32
  }
  func.func @transform_14(%arg0: i32, %arg1: i32) -> (i32, i32, i32) {
    %c0_i32 = arith.constant 0 : i32
    %c0_i32_0 = arith.constant 0 : i32
    %c0_i32_1 = arith.constant 0 : i32
    return %arg0, %c0_i32, %c0_i32_0 : i32, i32, i32
  }
}

</mosaic_0001>

<llo_original>
// kernel: transformer_forward.1
$region0: #{transformer_forward.1}
  #allocation0 [shape = 'u32[]', space=smem, size = 0x4, offset = 0x4, fixed_abs, tag = 'smem constant byte address 0x4 - core index']
  #allocation1 [shape = 'u32[144,128]{1,0:T(1,128)}', space=vmem, size = 0x12000, scoped, tag = 'internal scratch']
  #allocation2 [shape = 'f32[8,128]{1,0:T(8,128)}', space=vmem, size = 0x1000, scoped, tag = 'scratch operand']
  #allocation3 [shape = 'f32[8,8]{1,0:T(8,128)}', space=vmem, size = 0x1000, scoped, tag = 'scratch operand']
  %s0 = inlined_call_operand.hbm [shape: f32[2,8,128], index: 0, kind: input, shape index: {}]
  %s1 = inlined_call_operand.vmem [shape: f32[8,128], index: 1, kind: input, shape index: {}]
  %s2 = inlined_call_operand.hbm [shape: bf16[2,128,384], index: 2, kind: input, shape index: {}]
  %s3 = inlined_call_operand.vmem [shape: f32[2,1,384], index: 3, kind: input, shape index: {}]
  %s4 = inlined_call_operand.hbm [shape: bf16[2,128,128], index: 4, kind: input, shape index: {}]
  %s5 = inlined_call_operand.vmem [shape: f32[2,1,128], index: 5, kind: input, shape index: {}]
  %s6 = inlined_call_operand.hbm [shape: bf16[2,128,512], index: 6, kind: input, shape index: {}]
  %s7 = inlined_call_operand.vmem [shape: f32[2,1,512], index: 7, kind: input, shape index: {}]
  %s8 = inlined_call_operand.hbm [shape: bf16[2,512,128], index: 8, kind: input, shape index: {}]
  %s9 = inlined_call_operand.hbm [shape: f32[2,1,128], index: 9, kind: input, shape index: {}]
  %s10 = inlined_call_operand.vmem [shape: f32[2,1,128], index: 10, kind: input, shape index: {}]
  %s11 = inlined_call_operand.vmem [shape: f32[2,1,128], index: 11, kind: input, shape index: {}]
  %s12 = inlined_call_operand.vmem [shape: f32[2,1,128], index: 12, kind: input, shape index: {}]
  %s13 = inlined_call_operand.vmem [shape: f32[2,1,128], index: 13, kind: input, shape index: {}]
  %s14 = inlined_call_operand.hbm [shape: f32[2,8,128], index: 14, kind: output, shape index: {}]
  %s15 = sld [smem:[#allocation0]]
  $region121: #{transformer_forward.1} parent=0
    _
  %s17 = ssub.s32 1, %s15
  %s18 = scalar_select 0, %s17, %s15
  $region1: #{transformer_forward.1} parent=0
    #allocation4 [shape = 'u8[8192]{0}', space=vmem, size = 0x2000, scoped, tag = 'input window, operand 0']
    #allocation5 [shape = 's32[2]{0}', space=sflag, size = 0x8, scoped, tag = 'scoped memory for transformer_forward.1']
    #allocation6 [shape = 's32[2]{0}', space=sflag, size = 0x8, scoped, tag = 'scoped memory for transformer_forward.1']
    #allocation7 [shape = 'u8[196608]{0}', space=vmem, size = 0x30000, scoped, tag = 'input window, operand 2']
    #allocation8 [shape = 's32[2]{0}', space=sflag, size = 0x8, scoped, tag = 'scoped memory for transformer_forward.1']
    #allocation9 [shape = 'u8[65536]{0}', space=vmem, size = 0x10000, scoped, tag = 'input window, operand 4']
    #allocation10 [shape = 'u8[262144]{0}', space=vmem, size = 0x40000, scoped, tag = 'input window, operand 6']
    #allocation11 [shape = 's32[2]{0}', space=sflag, size = 0x8, scoped, tag = 'scoped memory for transformer_forward.1']
    #allocation12 [shape = 'u8[262144]{0}', space=vmem, size = 0x40000, scoped, tag = 'input window, operand 8']
    #allocation13 [shape = 'u8[1024]{0}', space=vmem, size = 0x400, scoped, tag = 'input window, operand 9']
    #allocation14 [shape = 's32[2]{0}', space=sflag, size = 0x8, scoped, tag = 'scoped memory for transformer_forward.1']
    #allocation15 [shape = 'u8[8192]{0}', space=vmem, size = 0x2000, scoped, tag = 'output window, operand 0']
    %19 = vsyncpa [#allocation5], 0
    %s20 = scalar_lea.sflag [#allocation5], 1
    %21 = vsyncpa %s20, 0
    %22 = vsyncpa [#allocation8], 0
    %s23 = scalar_lea.sflag [#allocation8], 1
    %24 = vsyncpa %s23, 0
    %25 = vsyncpa [#allocation11], 0
    %s26 = scalar_lea.sflag [#allocation11], 1
    %27 = vsyncpa %s26, 0
    %28 = vsyncpa [#allocation14], 0
    %s29 = scalar_lea.sflag [#allocation14], 1
    %30 = vsyncpa %s29, 0
    %31 = vsyncpa [#allocation6], 0
    %s32 = scalar_lea.sflag [#allocation6], 1
    %33 = vsyncpa %s32, 0
    loop: start=0, step=1, limit=6
    $region2: #{transformer_forward.1} parent=1 // loop_pre_header
      _
    $region3: #{transformer_forward.1} parent=1 // loop_header
      %s35 = sphi 0, %s39
      %p36 = scmp.ge.s32.totalorder %s35, 6
      %s42 = sphi 0, %s54
      %s43 = sphi 0, %s50
      %s44 = sphi 0, %s42
      %s45 = sphi 0, %s43
      %s46 = sphi 0, %s44
      %s47 = sphi 0, %s45
      %s57 = sphi 0, %s59
      %s60 = sphi 0, %s57
      %s61 = sphi 0, %s60
      %s77 = sphi 0, %s61
      %s81 = sphi 0, %s81
      %s83 = sphi 0, %s81
      %s84 = sphi 0, %s83
      %s98 = sphi 0, %s84
      %s104 = sphi 0, %s106
      %s107 = sphi 0, %s104
      %s108 = sphi 0, %s107
      %s124 = sphi 0, %s108
      %s130 = sphi 0, %s132
      %s133 = sphi 0, %s130
      %s134 = sphi 0, %s133
      %s150 = sphi 0, %s134
      %s156 = sphi 0, %s158
      %s159 = sphi 0, %s156
      %s160 = sphi 0, %s159
      %s176 = sphi 0, %s160
      %s182 = sphi 0, %s184
      %s185 = sphi 0, %s182
      %s186 = sphi 0, %s185
      %s202 = sphi 0, %s186
      %s208 = sphi 0, %s210
      %s211 = sphi 0, %s208
      %s212 = sphi 0, %s211
      %s228 = sphi 0, %s212
      %s234 = sphi 0, %s236
      %s237 = sphi 0, %s234
      %s238 = sphi 0, %s237
      %s254 = sphi 0, %s238
      %s260 = sphi 0, %s262
      %s263 = sphi 0, %s260
      %s264 = sphi 0, %s263
      %s280 = sphi 0, %s264
      %s286 = sphi 0, %s288
      %s289 = sphi 0, %s286
      %s290 = sphi 0, %s289
      %s306 = sphi 0, %s290
      %s312 = sphi 0, %s314
      %s315 = sphi 0, %s312
      %s316 = sphi 0, %s315
      %s332 = sphi 0, %s316
      %s338 = sphi 0, %s340
      %s341 = sphi 0, %s338
      %s342 = sphi 0, %s341
      %s358 = sphi 0, %s342
      %s364 = sphi 0, %s366
      %s367 = sphi 0, %s364
      %s368 = sphi 0, %s367
      %s384 = sphi 0, %s368
      %s390 = sphi 0, %s392
      %s393 = sphi 0, %s390
      %s394 = sphi 0, %s393
      %s410 = sphi 0, %s394
      %s416 = sphi 0, %s418
      %s419 = sphi 0, %s416
      %s420 = sphi 0, %s419
      %s436 = sphi 0, %s420
    $region4: #{transformer_forward.1} parent=1 // loop_header_branch
      %38 = sbr.rel (%p36) target = $region8
    $region5: #{transformer_forward.1} parent=1 // loop_body
      %s40 = ssub.s32 %s35, 1
      %s41 = ssub.s32 %s35, 2
      %s48 = sadd.s32 1, %s43
      %p49 = scmp.ge.s32.totalorder %s48, 2
      %s50 = scalar_select %p49, 0, %s48
      %s51 = sadd.s32 1, %s42
      %s52 = scalar_select %p49, %s51, %s42
      %p53 = scmp.ge.s32.totalorder %s52, 2
      %s54 = scalar_select %p53, 0, %s52
      %s55 = ssub.s32 %s42, %s54
      %p56 = scmp.eq.s32.totalorder %s55, 0
      %s58 = sadd.s32 %s57, 1
      %s59 = scalar_select %p56, %s57, %s58
      %p62 = pneg %p56
      %p63 = scmp.eq.s32.totalorder %s35, 3
      %p64 = por %p62, %p63
      %p65 = scmp.ne.s32.totalorder %s57, %s60
      %p66 = scmp.eq.s32.totalorder %s35, 0
      %p67 = por %p65, %p66
      %p68 = scmp.ne.s32.totalorder %s57, %s60
      %p69 = scmp.eq.s32.totalorder %s40, 3
      %p70 = por %p68, %p69
      %p71 = scmp.ne.s32.totalorder %s60, %s61
      %p72 = scmp.eq.s32.totalorder %s40, 0
      %p73 = por %p71, %p72
      %p74 = scmp.ne.s32.totalorder %s60, %s61
      %p75 = scmp.eq.s32.totalorder %s41, 3
      %p76 = por %p74, %p75
      %p78 = scmp.ne.s32.totalorder %s61, %s77
      %p79 = scmp.eq.s32.totalorder %s41, 0
      %p80 = por %p78, %p79
      %s82 = sadd.s32 %s81, 1
      %p85 = scmp.eq.s32.totalorder %s35, 3
      %p86 = scmp.ne.s32.totalorder %s81, %s83
      %p87 = scmp.eq.s32.totalorder %s35, 0
      %p88 = por %p86, %p87
      %p89 = scmp.ne.s32.totalorder %s81, %s83
      %p90 = scmp.eq.s32.totalorder %s40, 3
      %p91 = por %p89, %p90
      %p92 = scmp.ne.s32.totalorder %s83, %s84
      %p93 = scmp.eq.s32.totalorder %s40, 0
      %p94 = por %p92, %p93
      %p95 = scmp.ne.s32.totalorder %s83, %s84
      %p96 = scmp.eq.s32.totalorder %s41, 3
      %p97 = por %p95, %p96
      %p99 = scmp.ne.s32.totalorder %s84, %s98
      %p100 = scmp.eq.s32.totalorder %s41, 0
      %p101 = por %p99, %p100
      %s102 = ssub.s32 %s43, %s50
      %p103 = scmp.eq.s32.totalorder %s102, 0
      %s105 = sadd.s32 %s104, 1
      %s106 = scalar_select %p103, %s104, %s105
      %p109 = pneg %p103
      %p110 = scmp.eq.s32.totalorder %s35, 3
      %p111 = por %p109, %p110
      %p112 = scmp.ne.s32.totalorder %s104, %s107
      %p113 = scmp.eq.s32.totalorder %s35, 0
      %p114 = por %p112, %p113
      %p115 = scmp.ne.s32.totalorder %s104, %s107
      %p116 = scmp.eq.s32.totalorder %s40, 3
      %p117 = por %p115, %p116
      %p118 = scmp.ne.s32.totalorder %s107, %s108
      %p119 = scmp.eq.s32.totalorder %s40, 0
      %p120 = por %p118, %p119
      %p121 = scmp.ne.s32.totalorder %s107, %s108
      %p122 = scmp.eq.s32.totalorder %s41, 3
      %p123 = por %p121, %p122
      %p125 = scmp.ne.s32.totalorder %s108, %s124
      %p126 = scmp.eq.s32.totalorder %s41, 0
      %p127 = por %p125, %p126
      %s128 = ssub.s32 %s43, %s50
      %p129 = scmp.eq.s32.totalorder %s128, 0
      %s131 = sadd.s32 %s130, 1
      %s132 = scalar_select %p129, %s130, %s131
      %p135 = pneg %p129
      %p136 = scmp.eq.s32.totalorder %s35, 3
      %p137 = por %p135, %p136
      %p138 = scmp.ne.s32.totalorder %s130, %s133
      %p139 = scmp.eq.s32.totalorder %s35, 0
      %p140 = por %p138, %p139
      %p141 = scmp.ne.s32.totalorder %s130, %s133
      %p142 = scmp.eq.s32.totalorder %s40, 3
      %p143 = por %p141, %p142
      %p144 = scmp.ne.s32.totalorder %s133, %s134
      %p145 = scmp.eq.s32.totalorder %s40, 0
      %p146 = por %p144, %p145
      %p147 = scmp.ne.s32.totalorder %s133, %s134
      %p148 = scmp.eq.s32.totalorder %s41, 3
      %p149 = por %p147, %p148
      %p151 = scmp.ne.s32.totalorder %s134, %s150
      %p152 = scmp.eq.s32.totalorder %s41, 0
      %p153 = por %p151, %p152
      %s154 = ssub.s32 %s43, %s50
      %p155 = scmp.eq.s32.totalorder %s154, 0
      %s157 = sadd.s32 %s156, 1
      %s158 = scalar_select %p155, %s156, %s157
      %p161 = pneg %p155
      %p162 = scmp.eq.s32.totalorder %s35, 3
      %p163 = por %p161, %p162
      %p164 = scmp.ne.s32.totalorder %s156, %s159
      %p165 = scmp.eq.s32.totalorder %s35, 0
      %p166 = por %p164, %p165
      %p167 = scmp.ne.s32.totalorder %s156, %s159
      %p168 = scmp.eq.s32.totalorder %s40, 3
      %p169 = por %p167, %p168
      %p170 = scmp.ne.s32.totalorder %s159, %s160
      %p171 = scmp.eq.s32.totalorder %s40, 0
      %p172 = por %p170, %p171
      %p173 = scmp.ne.s32.totalorder %s159, %s160
      %p174 = scmp.eq.s32.totalorder %s41, 3
      %p175 = por %p173, %p174
      %p177 = scmp.ne.s32.totalorder %s160, %s176
      %p178 = scmp.eq.s32.totalorder %s41, 0
      %p179 = por %p177, %p178
      %s180 = ssub.s32 %s43, %s50
      %p181 = scmp.eq.s32.totalorder %s180, 0
      %s183 = sadd.s32 %s182, 1
      %s184 = scalar_select %p181, %s182, %s183
      %p187 = pneg %p181
      %p188 = scmp.eq.s32.totalorder %s35, 3
      %p189 = por %p187, %p188
      %p190 = scmp.ne.s32.totalorder %s182, %s185
      %p191 = scmp.eq.s32.totalorder %s35, 0
      %p192 = por %p190, %p191
      %p193 = scmp.ne.s32.totalorder %s182, %s185
      %p194 = scmp.eq.s32.totalorder %s40, 3
      %p195 = por %p193, %p194
      %p196 = scmp.ne.s32.totalorder %s185, %s186
      %p197 = scmp.eq.s32.totalorder %s40, 0
      %p198 = por %p196, %p197
      %p199 = scmp.ne.s32.totalorder %s185, %s186
      %p200 = scmp.eq.s32.totalorder %s41, 3
      %p201 = por %p199, %p200
      %p203 = scmp.ne.s32.totalorder %s186, %s202
      %p204 = scmp.eq.s32.totalorder %s41, 0
      %p205 = por %p203, %p204
      %s206 = ssub.s32 %s43, %s50
      %p207 = scmp.eq.s32.totalorder %s206, 0
      %s209 = sadd.s32 %s208, 1
      %s210 = scalar_select %p207, %s208, %s209
      %p213 = pneg %p207
      %p214 = scmp.eq.s32.totalorder %s35, 3
      %p215 = por %p213, %p214
      %p216 = scmp.ne.s32.totalorder %s208, %s211
      %p217 = scmp.eq.s32.totalorder %s35, 0
      %p218 = por %p216, %p217
      %p219 = scmp.ne.s32.totalorder %s208, %s211
      %p220 = scmp.eq.s32.totalorder %s40, 3
      %p221 = por %p219, %p220
      %p222 = scmp.ne.s32.totalorder %s211, %s212
      %p223 = scmp.eq.s32.totalorder %s40, 0
      %p224 = por %p222, %p223
      %p225 = scmp.ne.s32.totalorder %s211, %s212
      %p226 = scmp.eq.s32.totalorder %s41, 3
      %p227 = por %p225, %p226
      %p229 = scmp.ne.s32.totalorder %s212, %s228
      %p230 = scmp.eq.s32.totalorder %s41, 0
      %p231 = por %p229, %p230
      %s232 = ssub.s32 %s43, %s50
      %p233 = scmp.eq.s32.totalorder %s232, 0
      %s235 = sadd.s32 %s234, 1
      %s236 = scalar_select %p233, %s234, %s235
      %p239 = pneg %p233
      %p240 = scmp.eq.s32.totalorder %s35, 3
      %p241 = por %p239, %p240
      %p242 = scmp.ne.s32.totalorder %s234, %s237
      %p243 = scmp.eq.s32.totalorder %s35, 0
      %p244 = por %p242, %p243
      %p245 = scmp.ne.s32.totalorder %s234, %s237
      %p246 = scmp.eq.s32.totalorder %s40, 3
      %p247 = por %p245, %p246
      %p248 = scmp.ne.s32.totalorder %s237, %s238
      %p249 = scmp.eq.s32.totalorder %s40, 0
      %p250 = por %p248, %p249
      %p251 = scmp.ne.s32.totalorder %s237, %s238
      %p252 = scmp.eq.s32.totalorder %s41, 3
      %p253 = por %p251, %p252
      %p255 = scmp.ne.s32.totalorder %s238, %s254
      %p256 = scmp.eq.s32.totalorder %s41, 0
      %p257 = por %p255, %p256
      %s258 = ssub.s32 %s43, %s50
      %p259 = scmp.eq.s32.totalorder %s258, 0
      %s261 = sadd.s32 %s260, 1
      %s262 = scalar_select %p259, %s260, %s261
      %p265 = pneg %p259
      %p266 = scmp.eq.s32.totalorder %s35, 3
      %p267 = por %p265, %p266
      %p268 = scmp.ne.s32.totalorder %s260, %s263
      %p269 = scmp.eq.s32.totalorder %s35, 0
      %p270 = por %p268, %p269
      %p271 = scmp.ne.s32.totalorder %s260, %s263
      %p272 = scmp.eq.s32.totalorder %s40, 3
      %p273 = por %p271, %p272
      %p274 = scmp.ne.s32.totalorder %s263, %s264
      %p275 = scmp.eq.s32.totalorder %s40, 0
      %p276 = por %p274, %p275
      %p277 = scmp.ne.s32.totalorder %s263, %s264
      %p278 = scmp.eq.s32.totalorder %s41, 3
      %p279 = por %p277, %p278
      %p281 = scmp.ne.s32.totalorder %s264, %s280
      %p282 = scmp.eq.s32.totalorder %s41, 0
      %p283 = por %p281, %p282
      %s284 = ssub.s32 %s43, %s50
      %p285 = scmp.eq.s32.totalorder %s284, 0
      %s287 = sadd.s32 %s286, 1
      %s288 = scalar_select %p285, %s286, %s287
      %p291 = pneg %p285
      %p292 = scmp.eq.s32.totalorder %s35, 3
      %p293 = por %p291, %p292
      %p294 = scmp.ne.s32.totalorder %s286, %s289
      %p295 = scmp.eq.s32.totalorder %s35, 0
      %p296 = por %p294, %p295
      %p297 = scmp.ne.s32.totalorder %s286, %s289
      %p298 = scmp.eq.s32.totalorder %s40, 3
      %p299 = por %p297, %p298
      %p300 = scmp.ne.s32.totalorder %s289, %s290
      %p301 = scmp.eq.s32.totalorder %s40, 0
      %p302 = por %p300, %p301
      %p303 = scmp.ne.s32.totalorder %s289, %s290
      %p304 = scmp.eq.s32.totalorder %s41, 3
      %p305 = por %p303, %p304
      %p307 = scmp.ne.s32.totalorder %s290, %s306
      %p308 = scmp.eq.s32.totalorder %s41, 0
      %p309 = por %p307, %p308
      %s310 = ssub.s32 %s43, %s50
      %p311 = scmp.eq.s32.totalorder %s310, 0
      %s313 = sadd.s32 %s312, 1
      %s314 = scalar_select %p311, %s312, %s313
      %p317 = pneg %p311
      %p318 = scmp.eq.s32.totalorder %s35, 3
      %p319 = por %p317, %p318
      %p320 = scmp.ne.s32.totalorder %s312, %s315
      %p321 = scmp.eq.s32.totalorder %s35, 0
      %p322 = por %p320, %p321
      %p323 = scmp.ne.s32.totalorder %s312, %s315
      %p324 = scmp.eq.s32.totalorder %s40, 3
      %p325 = por %p323, %p324
      %p326 = scmp.ne.s32.totalorder %s315, %s316
      %p327 = scmp.eq.s32.totalorder %s40, 0
      %p328 = por %p326, %p327
      %p329 = scmp.ne.s32.totalorder %s315, %s316
      %p330 = scmp.eq.s32.totalorder %s41, 3
      %p331 = por %p329, %p330
      %p333 = scmp.ne.s32.totalorder %s316, %s332
      %p334 = scmp.eq.s32.totalorder %s41, 0
      %p335 = por %p333, %p334
      %s336 = ssub.s32 %s43, %s50
      %p337 = scmp.eq.s32.totalorder %s336, 0
      %s339 = sadd.s32 %s338, 1
      %s340 = scalar_select %p337, %s338, %s339
      %p343 = pneg %p337
      %p344 = scmp.eq.s32.totalorder %s35, 3
      %p345 = por %p343, %p344
      %p346 = scmp.ne.s32.totalorder %s338, %s341
      %p347 = scmp.eq.s32.totalorder %s35, 0
      %p348 = por %p346, %p347
      %p349 = scmp.ne.s32.totalorder %s338, %s341
      %p350 = scmp.eq.s32.totalorder %s40, 3
      %p351 = por %p349, %p350
      %p352 = scmp.ne.s32.totalorder %s341, %s342
      %p353 = scmp.eq.s32.totalorder %s40, 0
      %p354 = por %p352, %p353
      %p355 = scmp.ne.s32.totalorder %s341, %s342
      %p356 = scmp.eq.s32.totalorder %s41, 3
      %p357 = por %p355, %p356
      %p359 = scmp.ne.s32.totalorder %s342, %s358
      %p360 = scmp.eq.s32.totalorder %s41, 0
      %p361 = por %p359, %p360
      %s362 = ssub.s32 %s43, %s50
      %p363 = scmp.eq.s32.totalorder %s362, 0
      %s365 = sadd.s32 %s364, 1
      %s366 = scalar_select %p363, %s364, %s365
      %p369 = pneg %p363
      %p370 = scmp.eq.s32.totalorder %s35, 3
      %p371 = por %p369, %p370
      %p372 = scmp.ne.s32.totalorder %s364, %s367
      %p373 = scmp.eq.s32.totalorder %s35, 0
      %p374 = por %p372, %p373
      %p375 = scmp.ne.s32.totalorder %s364, %s367
      %p376 = scmp.eq.s32.totalorder %s40, 3
      %p377 = por %p375, %p376
      %p378 = scmp.ne.s32.totalorder %s367, %s368
      %p379 = scmp.eq.s32.totalorder %s40, 0
      %p380 = por %p378, %p379
      %p381 = scmp.ne.s32.totalorder %s367, %s368
      %p382 = scmp.eq.s32.totalorder %s41, 3
      %p383 = por %p381, %p382
      %p385 = scmp.ne.s32.totalorder %s368, %s384
      %p386 = scmp.eq.s32.totalorder %s41, 0
      %p387 = por %p385, %p386
      %s388 = ssub.s32 %s43, %s50
      %p389 = scmp.eq.s32.totalorder %s388, 0
      %s391 = sadd.s32 %s390, 1
      %s392 = scalar_select %p389, %s390, %s391
      %p395 = pneg %p389
      %p396 = scmp.eq.s32.totalorder %s35, 3
      %p397 = por %p395, %p396
      %p398 = scmp.ne.s32.totalorder %s390, %s393
      %p399 = scmp.eq.s32.totalorder %s35, 0
      %p400 = por %p398, %p399
      %p401 = scmp.ne.s32.totalorder %s390, %s393
      %p402 = scmp.eq.s32.totalorder %s40, 3
      %p403 = por %p401, %p402
      %p404 = scmp.ne.s32.totalorder %s393, %s394
      %p405 = scmp.eq.s32.totalorder %s40, 0
      %p406 = por %p404, %p405
      %p407 = scmp.ne.s32.totalorder %s393, %s394
      %p408 = scmp.eq.s32.totalorder %s41, 3
      %p409 = por %p407, %p408
      %p411 = scmp.ne.s32.totalorder %s394, %s410
      %p412 = scmp.eq.s32.totalorder %s41, 0
      %p413 = por %p411, %p412
      %s414 = ssub.s32 %s42, %s54
      %p415 = scmp.eq.s32.totalorder %s414, 0
      %s417 = sadd.s32 %s416, 1
      %s418 = scalar_select %p415, %s416, %s417
      %p421 = pneg %p415
      %p422 = scmp.eq.s32.totalorder %s35, 3
      %p423 = por %p421, %p422
      %p424 = scmp.ne.s32.totalorder %s416, %s419
      %p425 = scmp.eq.s32.totalorder %s35, 0
      %p426 = por %p424, %p425
      %p427 = scmp.ne.s32.totalorder %s416, %s419
      %p428 = scmp.eq.s32.totalorder %s40, 3
      %p429 = por %p427, %p428
      %p430 = scmp.ne.s32.totalorder %s419, %s420
      %p431 = scmp.eq.s32.totalorder %s40, 0
      %p432 = por %p430, %p431
      %p433 = scmp.ne.s32.totalorder %s419, %s420
      %p434 = scmp.eq.s32.totalorder %s41, 3
      %p435 = por %p433, %p434
      %p437 = scmp.ne.s32.totalorder %s420, %s436
      %p438 = scmp.eq.s32.totalorder %s41, 0
      %p439 = por %p437, %p438
      %p440 = scmp.le.s32.totalorder 1, %s35
      %p441 = scmp.lt.s32.totalorder %s35, 5
      %p442 = pnand %p440, %p441
      %p443 = pneg %p442
      // Predicated region
      $region9: #{transformer_forward.1} parent=5 // pred_check
        _
      $region10: #{transformer_forward.1} parent=5 // pred_check_branch
        %445 = sbr.rel (%p442) target = $region12
      $region11: #{transformer_forward.1} parent=5 // pred_region
        %s446 = ssub.s32 %s35, 1
        // Predicated region
        $region13: #{transformer_forward.1} parent=11 // pred_check
          %p447 = pneg %p94
        $region14: #{transformer_forward.1} parent=11 // pred_check_branch
          %449 = sbr.rel (%p447) target = $region16
        $region15: #{transformer_forward.1} parent=11 // pred_region
          _
        $region16: #{transformer_forward.1} parent=11 // pred_fallthru
          _
      $region12: #{transformer_forward.1} parent=5 // pred_fallthru
        _
      %p450 = scmp.lt.s32.totalorder %s35, 4
      // Predicated region
      $region17: #{transformer_forward.1} parent=5 // pred_check
        %p451 = pneg %p450
      $region18: #{transformer_forward.1} parent=5 // pred_check_branch
        %453 = sbr.rel (%p451) target = $region20
      $region19: #{transformer_forward.1} parent=5 // pred_region
        // Predicated region
        $region21: #{transformer_forward.1} parent=19 // pred_check
          %p454 = pneg %p67
        $region22: #{transformer_forward.1} parent=19 // pred_check_branch
          %456 = sbr.rel (%p454) target = $region24
        $region23: #{transformer_forward.1} parent=19 // pred_region
          %s457 = sand.u32 %s57, 1
          %s458 = scalar_lea.sflag [#allocation5], %s457
          %s459 = sand.u32 %s57, 1
          %s460 = smul.addr %s459, 8
          %s461 = scalar_lea.vmem [#allocation4], %s460
          %s463 = ssub.s32 128, 128
          %464 = vsyncadd %s458, %s463
          %s465 = smul.addr %s42, 128
          %s466 = scalar_lea.hbm %s0, %s465
          %s468 = sshll.u32 %s461, 4
          %s469 = int_to_ptr.vmem [resolvable:$true] %s468
          %471 = dma.hbm_to_vmem [thread:$0]  %s466, 128, %s469, %s458
        $region24: #{transformer_forward.1} parent=19 // pred_fallthru
          _
        // Predicated region
        $region25: #{transformer_forward.1} parent=19 // pred_check
          %p472 = pneg %p114
        $region26: #{transformer_forward.1} parent=19 // pred_check_branch
          %474 = sbr.rel (%p472) target = $region28
        $region27: #{transformer_forward.1} parent=19 // pred_region
          %s475 = sand.u32 %s35, 1
          %s476 = scalar_lea.sflag [#allocation8], %s475
          %s477 = sand.u32 %s104, 1
          %s478 = smul.addr %s477, 192
          %s479 = scalar_lea.vmem [#allocation7], %s478
          %s481 = ssub.s32 3072, 3072
          %482 = vsyncadd %s476, %s481
          %s483 = smul.addr %s43, 48
          %s484 = smul.addr %s483, 64
          %s485 = scalar_lea.hbm %s2, %s484
          %s486 = sshll.u32 %s479, 4
          %s487 = int_to_ptr.vmem [resolvable:$true] %s486
          %492 = dma.hbm_to_vmem [thread:$0]  %s485, 3072, %s487, %s476, 192, 192, 12
        $region28: #{transformer_forward.1} parent=19 // pred_fallthru
          _
        // Predicated region
        $region29: #{transformer_forward.1} parent=19 // pred_check
          %p493 = pneg %p140
        $region30: #{transformer_forward.1} parent=19 // pred_check_branch
          %495 = sbr.rel (%p493) target = $region32
        $region31: #{transformer_forward.1} parent=19 // pred_region
          %p496 = scmp.lt.s32.totalorder %s43, 1
          %s497 = scalar_select %p496, %s43, 1
          %s498 = smul.addr %s497, 3
          %s499 = scalar_lea.vmem %s3, %s498
        $region32: #{transformer_forward.1} parent=19 // pred_fallthru
          _
        // Predicated region
        $region33: #{transformer_forward.1} parent=19 // pred_check
          %p500 = pneg %p166
        $region34: #{transformer_forward.1} parent=19 // pred_check_branch
          %502 = sbr.rel (%p500) target = $region36
        $region35: #{transformer_forward.1} parent=19 // pred_region
          %s503 = sand.u32 %s35, 1
          %s504 = scalar_lea.sflag [#allocation8], %s503
          %s505 = sand.u32 %s156, 1
          %s506 = smul.addr %s505, 64
          %s507 = scalar_lea.vmem [#allocation9], %s506
          %s509 = ssub.s32 1024, 1024
          %510 = vsyncadd %s504, %s509
          %s511 = smul.addr %s43, 16
          %s512 = smul.addr %s511, 64
          %s513 = scalar_lea.hbm %s4, %s512
          %s514 = sshll.u32 %s507, 4
          %s515 = int_to_ptr.vmem [resolvable:$true] %s514
          %520 = dma.hbm_to_vmem [thread:$0]  %s513, 1024, %s515, %s504, 64, 64, 4
        $region36: #{transformer_forward.1} parent=19 // pred_fallthru
          _
        // Predicated region
        $region37: #{transformer_forward.1} parent=19 // pred_check
          %p521 = pneg %p192
        $region38: #{transformer_forward.1} parent=19 // pred_check_branch
          %523 = sbr.rel (%p521) target = $region40
        $region39: #{transformer_forward.1} parent=19 // pred_region
          %p524 = scmp.lt.s32.totalorder %s43, 1
          %s525 = scalar_select %p524, %s43, 1
          %s526 = scalar_lea.vmem %s5, %s525
        $region40: #{transformer_forward.1} parent=19 // pred_fallthru
          _
        // Predicated region
        $region41: #{transformer_forward.1} parent=19 // pred_check
          %p527 = pneg %p218
        $region42: #{transformer_forward.1} parent=19 // pred_check_branch
          %529 = sbr.rel (%p527) target = $region44
        $region43: #{transformer_forward.1} parent=19 // pred_region
          %s530 = sand.u32 %s35, 1
          %s531 = scalar_lea.sflag [#allocation11], %s530
          %s532 = sand.u32 %s208, 1
          %s533 = smul.addr %s532, 256
          %s534 = scalar_lea.vmem [#allocation10], %s533
          %s536 = ssub.s32 4096, 4096
          %537 = vsyncadd %s531, %s536
          %s538 = smul.addr %s43, 64
          %s539 = smul.addr %s538, 64
          %s540 = scalar_lea.hbm %s6, %s539
          %s541 = sshll.u32 %s534, 4
          %s542 = int_to_ptr.vmem [resolvable:$true] %s541
          %547 = dma.hbm_to_vmem [thread:$0]  %s540, 4096, %s542, %s531, 256, 256, 16
        $region44: #{transformer_forward.1} parent=19 // pred_fallthru
          _
        // Predicated region
        $region45: #{transformer_forward.1} parent=19 // pred_check
          %p548 = pneg %p244
        $region46: #{transformer_forward.1} parent=19 // pred_check_branch
          %550 = sbr.rel (%p548) target = $region48
        $region47: #{transformer_forward.1} parent=19 // pred_region
          %p551 = scmp.lt.s32.totalorder %s43, 1
          %s552 = scalar_select %p551, %s43, 1
          %s553 = smul.addr %s552, 4
          %s554 = scalar_lea.vmem %s7, %s553
        $region48: #{transformer_forward.1} parent=19 // pred_fallthru
          _
        // Predicated region
        $region49: #{transformer_forward.1} parent=19 // pred_check
          %p555 = pneg %p270
        $region50: #{transformer_forward.1} parent=19 // pred_check_branch
          %557 = sbr.rel (%p555) target = $region52
        $region51: #{transformer_forward.1} parent=19 // pred_region
          %s558 = sand.u32 %s35, 1
          %s559 = scalar_lea.sflag [#allocation11], %s558
          %s560 = sand.u32 %s260, 1
          %s561 = smul.addr %s560, 256
          %s562 = scalar_lea.vmem [#allocation12], %s561
          %s564 = ssub.s32 4096, 4096
          %565 = vsyncadd %s559, %s564
          %s566 = smul.addr %s43, 64
          %s567 = smul.addr %s566, 64
          %s568 = scalar_lea.hbm %s8, %s567
          %s569 = sshll.u32 %s562, 4
          %s570 = int_to_ptr.vmem [resolvable:$true] %s569
          %575 = dma.hbm_to_vmem [thread:$0]  %s568, 4096, %s570, %s559, 64, 64, 4
        $region52: #{transformer_forward.1} parent=19 // pred_fallthru
          _
        // Predicated region
        $region53: #{transformer_forward.1} parent=19 // pred_check
          %p576 = pneg %p296
        $region54: #{transformer_forward.1} parent=19 // pred_check_branch
          %578 = sbr.rel (%p576) target = $region56
        $region55: #{transformer_forward.1} parent=19 // pred_region
          %s579 = sand.u32 %s286, 1
          %s580 = scalar_lea.sflag [#allocation14], %s579
          %s581 = sand.u32 %s286, 1
          %s582 = scalar_lea.vmem [#allocation13], %s581
          %s584 = ssub.s32 16, 16
          %585 = vsyncadd %s580, %s584
          %s586 = smul.addr %s43, 16
          %s587 = scalar_lea.hbm %s9, %s586
          %s589 = sshll.u32 %s582, 4
          %s590 = int_to_ptr.vmem [resolvable:$true] %s589
          %592 = dma.hbm_to_vmem [thread:$0]  %s587, 16, %s590, %s580
        $region56: #{transformer_forward.1} parent=19 // pred_fallthru
          _
        // Predicated region
        $region57: #{transformer_forward.1} parent=19 // pred_check
          %p593 = pneg %p322
        $region58: #{transformer_forward.1} parent=19 // pred_check_branch
          %595 = sbr.rel (%p593) target = $region60
        $region59: #{transformer_forward.1} parent=19 // pred_region
          %p596 = scmp.lt.s32.totalorder %s43, 1
          %s597 = scalar_select %p596, %s43, 1
          %s598 = scalar_lea.vmem %s10, %s597
        $region60: #{transformer_forward.1} parent=19 // pred_fallthru
          _
        // Predicated region
        $region61: #{transformer_forward.1} parent=19 // pred_check
          %p599 = pneg %p348
        $region62: #{transformer_forward.1} parent=19 // pred_check_branch
          %601 = sbr.rel (%p599) target = $region64
        $region63: #{transformer_forward.1} parent=19 // pred_region
          %p602 = scmp.lt.s32.totalorder %s43, 1
          %s603 = scalar_select %p602, %s43, 1
          %s604 = scalar_lea.vmem %s11, %s603
        $region64: #{transformer_forward.1} parent=19 // pred_fallthru
          _
        // Predicated region
        $region65: #{transformer_forward.1} parent=19 // pred_check
          %p605 = pneg %p374
        $region66: #{transformer_forward.1} parent=19 // pred_check_branch
          %607 = sbr.rel (%p605) target = $region68
        $region67: #{transformer_forward.1} parent=19 // pred_region
          %p608 = scmp.lt.s32.totalorder %s43, 1
          %s609 = scalar_select %p608, %s43, 1
          %s610 = scalar_lea.vmem %s12, %s609
        $region68: #{transformer_forward.1} parent=19 // pred_fallthru
          _
        // Predicated region
        $region69: #{transformer_forward.1} parent=19 // pred_check
          %p611 = pneg %p400
        $region70: #{transformer_forward.1} parent=19 // pred_check_branch
          %613 = sbr.rel (%p611) target = $region72
        $region71: #{transformer_forward.1} parent=19 // pred_region
          %p614 = scmp.lt.s32.totalorder %s43, 1
          %s615 = scalar_select %p614, %s43, 1
          %s616 = scalar_lea.vmem %s13, %s615
        $region72: #{transformer_forward.1} parent=19 // pred_fallthru
          _
      $region20: #{transformer_forward.1} parent=5 // pred_fallthru
        _
      %p617 = scmp.le.s32.totalorder 1, %s35
      %p618 = scmp.lt.s32.totalorder %s35, 5
      %p619 = pnand %p617, %p618
      %p620 = pneg %p619
      // Predicated region
      $region73: #{transformer_forward.1} parent=5 // pred_check
        _
      $region74: #{transformer_forward.1} parent=5 // pred_check_branch
        %622 = sbr.rel (%p619) target = $region76
      $region75: #{transformer_forward.1} parent=5 // pred_region
        %s623 = ssub.s32 %s35, 1
        %s624 = sand.u32 %s60, 1
        %s625 = scalar_lea.sflag [#allocation5], %s624
        %s626 = sand.u32 %s60, 1
        %s627 = smul.addr %s626, 8
        %s628 = scalar_lea.vmem [#allocation4], %s627
        // Predicated region
        $region77: #{transformer_forward.1} parent=75 // pred_check
          %p629 = pneg %p73
        $region78: #{transformer_forward.1} parent=75 // pred_check_branch
          %631 = sbr.rel (%p629) target = $region80
        $region79: #{transformer_forward.1} parent=75 // pred_region
          %632 = dma.done %s625, 128
        $region80: #{transformer_forward.1} parent=75 // pred_fallthru
          _
        %s633 = sand.u32 %s40, 1
        %s634 = scalar_lea.sflag [#allocation8], %s633
        %s635 = sand.u32 %s107, 1
        %s636 = smul.addr %s635, 192
        %s637 = scalar_lea.vmem [#allocation7], %s636
        // Predicated region
        $region81: #{transformer_forward.1} parent=75 // pred_check
          %p638 = pneg %p120
        $region82: #{transformer_forward.1} parent=75 // pred_check_branch
          %640 = sbr.rel (%p638) target = $region84
        $region83: #{transformer_forward.1} parent=75 // pred_region
          %641 = dma.done %s634, 3072
        $region84: #{transformer_forward.1} parent=75 // pred_fallthru
          _
        %s642 = sand.u32 %s40, 1
        %s643 = scalar_lea.sflag [#allocation8], %s642
        %s644 = sand.u32 %s159, 1
        %s645 = smul.addr %s644, 64
        %s646 = scalar_lea.vmem [#allocation9], %s645
        // Predicated region
        $region85: #{transformer_forward.1} parent=75 // pred_check
          %p647 = pneg %p172
        $region86: #{transformer_forward.1} parent=75 // pred_check_branch
          %649 = sbr.rel (%p647) target = $region88
        $region87: #{transformer_forward.1} parent=75 // pred_region
          %650 = dma.done %s643, 1024
        $region88: #{transformer_forward.1} parent=75 // pred_fallthru
          _
        %s651 = sand.u32 %s40, 1
        %s652 = scalar_lea.sflag [#allocation11], %s651
        %s653 = sand.u32 %s211, 1
        %s654 = smul.addr %s653, 256
        %s655 = scalar_lea.vmem [#allocation10], %s654
        // Predicated region
        $region89: #{transformer_forward.1} parent=75 // pred_check
          %p656 = pneg %p224
        $region90: #{transformer_forward.1} parent=75 // pred_check_branch
          %658 = sbr.rel (%p656) target = $region92
        $region91: #{transformer_forward.1} parent=75 // pred_region
          %659 = dma.done %s652, 4096
        $region92: #{transformer_forward.1} parent=75 // pred_fallthru
          _
        %s660 = sand.u32 %s40, 1
        %s661 = scalar_lea.sflag [#allocation11], %s660
        %s662 = sand.u32 %s263, 1
        %s663 = smul.addr %s662, 256
        %s664 = scalar_lea.vmem [#allocation12], %s663
        // Predicated region
        $region93: #{transformer_forward.1} parent=75 // pred_check
          %p665 = pneg %p276
        $region94: #{transformer_forward.1} parent=75 // pred_check_branch
          %667 = sbr.rel (%p665) target = $region96
        $region95: #{transformer_forward.1} parent=75 // pred_region
          %668 = dma.done %s661, 4096
        $region96: #{transformer_forward.1} parent=75 // pred_fallthru
          _
        %s669 = sand.u32 %s289, 1
        %s670 = scalar_lea.sflag [#allocation14], %s669
        %s671 = sand.u32 %s289, 1
        %s672 = scalar_lea.vmem [#allocation13], %s671
        // Predicated region
        $region97: #{transformer_forward.1} parent=75 // pred_check
          %p673 = pneg %p302
        $region98: #{transformer_forward.1} parent=75 // pred_check_branch
          %675 = sbr.rel (%p673) target = $region100
        $region99: #{transformer_forward.1} parent=75 // pred_region
          %676 = dma.done %s670, 16
        $region100: #{transformer_forward.1} parent=75 // pred_fallthru
          _
        %s677 = sand.u32 %s60, 1
        %s678 = scalar_lea.sflag [#allocation5], %s677
        %s679 = sand.u32 %s60, 1
        %s680 = smul.addr %s679, 8
        %s681 = scalar_lea.vmem [#allocation4], %s680
        %p682 = pneg %p73
        %p683 = pneg %p70
        %p684 = pneg %p94
        %p685 = pneg %p91
        %s686 = sand.u32 %s40, 1
        %s687 = scalar_lea.sflag [#allocation8], %s686
        %s688 = sand.u32 %s107, 1
        %s689 = smul.addr %s688, 192
        %s690 = scalar_lea.vmem [#allocation7], %s689
        %p691 = pneg %p120
        %p692 = pneg %p117
        %p693 = scmp.lt.s32.totalorder %s45, 1
        %s694 = scalar_select %p693, %s45, 1
        %s695 = smul.addr %s694, 3
        %s696 = scalar_lea.vmem %s3, %s695
        %p697 = pneg %p146
        %p698 = pneg %p143
        %s699 = sand.u32 %s40, 1
        %s700 = scalar_lea.sflag [#allocation8], %s699
        %s701 = sand.u32 %s159, 1
        %s702 = smul.addr %s701, 64
        %s703 = scalar_lea.vmem [#allocation9], %s702
        %p704 = pneg %p172
        %p705 = pneg %p169
        %p706 = scmp.lt.s32.totalorder %s45, 1
        %s707 = scalar_select %p706, %s45, 1
        %s708 = scalar_lea.vmem %s5, %s707
        %p709 = pneg %p198
        %p710 = pneg %p195
        %s711 = sand.u32 %s40, 1
        %s712 = scalar_lea.sflag [#allocation11], %s711
        %s713 = sand.u32 %s211, 1
        %s714 = smul.addr %s713, 256
        %s715 = scalar_lea.vmem [#allocation10], %s714
        %p716 = pneg %p224
        %p717 = pneg %p221
        %p718 = scmp.lt.s32.totalorder %s45, 1
        %s719 = scalar_select %p718, %s45, 1
        %s720 = smul.addr %s719, 4
        %s721 = scalar_lea.vmem %s7, %s720
        %p722 = pneg %p250
        %p723 = pneg %p247
        %s724 = sand.u32 %s40, 1
        %s725 = scalar_lea.sflag [#allocation11], %s724
        %s726 = sand.u32 %s263, 1
        %s727 = smul.addr %s726, 256
        %s728 = scalar_lea.vmem [#allocation12], %s727
        %p729 = pneg %p276
        %p730 = pneg %p273
        %s731 = sand.u32 %s289, 1
        %s732 = scalar_lea.sflag [#allocation14], %s731
        %s733 = sand.u32 %s289, 1
        %s734 = scalar_lea.vmem [#allocation13], %s733
        %p735 = pneg %p302
        %p736 = pneg %p299
        %p737 = scmp.lt.s32.totalorder %s45, 1
        %s738 = scalar_select %p737, %s45, 1
        %s739 = scalar_lea.vmem %s10, %s738
        %p740 = pneg %p328
        %p741 = pneg %p325
        %p742 = scmp.lt.s32.totalorder %s45, 1
        %s743 = scalar_select %p742, %s45, 1
        %s744 = scalar_lea.vmem %s11, %s743
        %p745 = pneg %p354
        %p746 = pneg %p351
        %p747 = scmp.lt.s32.totalorder %s45, 1
        %s748 = scalar_select %p747, %s45, 1
        %s749 = scalar_lea.vmem %s12, %s748
        %p750 = pneg %p380
        %p751 = pneg %p377
        %p752 = scmp.lt.s32.totalorder %s45, 1
        %s753 = scalar_select %p752, %s45, 1
        %s754 = scalar_lea.vmem %s13, %s753
        %p755 = pneg %p406
        %p756 = pneg %p403
        %p757 = pneg %p432
        %p758 = pneg %p429
        %s759 = sand.u32 %s419, 1
        %s760 = scalar_lea.sflag [#allocation6], %s759
        %s761 = sand.u32 %s419, 1
        %s762 = smul.addr %s761, 8
        %s763 = scalar_lea.vmem [#allocation15], %s762
        %p764 = scmp.lt.s32.totalorder %s45, 1
        %s765 = scalar_select %p764, %s45, 1
        %s766 = smul.addr %s765, 3
        %s767 = scalar_lea.vmem %s3, %s766
        %p768 = scmp.lt.s32.totalorder %s45, 1
        %s769 = scalar_select %p768, %s45, 1
        %s770 = scalar_lea.vmem %s5, %s769
        %p771 = scmp.lt.s32.totalorder %s45, 1
        %s772 = scalar_select %p771, %s45, 1
        %s773 = smul.addr %s772, 4
        %s774 = scalar_lea.vmem %s7, %s773
        %p775 = scmp.lt.s32.totalorder %s45, 1
        %s776 = scalar_select %p775, %s45, 1
        %s777 = scalar_lea.vmem %s10, %s776
        %p778 = scmp.lt.s32.totalorder %s45, 1
        %s779 = scalar_select %p778, %s45, 1
        %s780 = scalar_lea.vmem %s11, %s779
        %p781 = scmp.lt.s32.totalorder %s45, 1
        %s782 = scalar_select %p781, %s45, 1
        %s783 = scalar_lea.vmem %s12, %s782
        %p784 = scmp.lt.s32.totalorder %s45, 1
        %s785 = scalar_select %p784, %s45, 1
        %s786 = scalar_lea.vmem %s13, %s785
        %p788 = scmp.eq.s32.totalorder %s45, 0
        // Predicated region
        $region101: #{transformer_forward.1} parent=75 // pred_check
          %p789 = pneg %p788
        $region102: #{transformer_forward.1} parent=75 // pred_check_branch
          %791 = sbr.rel (%p789) target = $region104
        $region103: #{transformer_forward.1} parent=75 // pred_region
          %v792 = vld [vmem:[%s628] sm:$0xff]
          %v793 = vld [vmem:[%s1] sm:$0xff]
          %v794 = vadd.f32 %v792, %v793
          %795 = vst [vmem:[#allocation2] sm:$0xff] %v794
          %v796 = vlaneseq
          %v797 = vshrl.u32 %v796, 7
          %v798 = vlaneseq
          %v799 = vand.u32 %v798, 127
          %vm800 = vcmp.le.s32.totalorder %v799, %v797
          %v801 = vsel %vm800, 0.0, -1e+30
          %vm802 = vcmask 64512
          %803 = vst.msk [vmem:[#allocation3] sm:$0xff] %vm802, %v801
        $region104: #{transformer_forward.1} parent=75 // pred_fallthru
          _
        %v804 = vld [vmem:[#allocation2] sm:$0xff]
        %v805 = vpack.c.bf16 %v804, %v804
        %v806 = vld [vmem:[%s637] sm:$0xff]
        %v807 = vld [vmem:[%s637 + $0x8] sm:$0xf]
        %v808 = vld [vmem:[%s637 + $0xc] sm:$0xff]
        %v809 = vld [vmem:[%s637 + $0x14] sm:$0xf]
        %v810 = vld [vmem:[%s637 + $0x18] sm:$0xff]
        %v811 = vld [vmem:[%s637 + $0x20] sm:$0xf]
        %v812 = vld [vmem:[%s637 + $0x24] sm:$0xff]
        %v813 = vld [vmem:[%s637 + $0x2c] sm:$0xf]
        %v814 = vld [vmem:[%s637 + $0x30] sm:$0xff]
        %v815 = vld [vmem:[%s637 + $0x38] sm:$0xf]
        %v816 = vld [vmem:[%s637 + $0x3c] sm:$0xff]
        %v817 = vld [vmem:[%s637 + $0x44] sm:$0xf]
        %v818 = vld [vmem:[%s637 + $0x48] sm:$0xff]
        %v819 = vld [vmem:[%s637 + $0x50] sm:$0xf]
        %v820 = vld [vmem:[%s637 + $0x54] sm:$0xff]
        %v821 = vld [vmem:[%s637 + $0x5c] sm:$0xf]
        %v822 = vld [vmem:[%s637 + $0x60] sm:$0xff]
        %v823 = vld [vmem:[%s637 + $0x68] sm:$0xf]
        %v824 = vld [vmem:[%s637 + $0x6c] sm:$0xff]
        %v825 = vld [vmem:[%s637 + $0x74] sm:$0xf]
        %v826 = vld [vmem:[%s637 + $0x78] sm:$0xff]
        %v827 = vld [vmem:[%s637 + $0x80] sm:$0xf]
        %v828 = vld [vmem:[%s637 + $0x84] sm:$0xff]
        %v829 = vld [vmem:[%s637 + $0x8c] sm:$0xf]
        %v830 = vld [vmem:[%s637 + $0x90] sm:$0xff]
        %v831 = vld [vmem:[%s637 + $0x98] sm:$0xf]
        %v832 = vld [vmem:[%s637 + $0x9c] sm:$0xff]
        %v833 = vld [vmem:[%s637 + $0xa4] sm:$0xf]
        %v834 = vld [vmem:[%s637 + $0xa8] sm:$0xff]
        %v835 = vld [vmem:[%s637 + $0xb0] sm:$0xf]
        %v836 = vld [vmem:[%s637 + $0xb4] sm:$0xff]
        %v837 = vld [vmem:[%s637 + $0xbc] sm:$0xf]
        %v838 = vld [vmem:[%s767] sm:$0x7]
        %v840 = vlaneseq
        %v841 = vshrl.u32 %v840, 7
        %v842 = vsub.s32 0, %v841
        %v843 = vrot.slane %v838, %v842
        %v844 = vlaneseq
        %v845 = vshrl.u32 %v844, 7
        %v846 = vsub.s32 1, %v845
        %v847 = vrot.slane %v838, %v846
        %v848 = vlaneseq
        %v849 = vshrl.u32 %v848, 7
        %v850 = vsub.s32 2, %v849
        %v851 = vrot.slane %v838, %v850
        %v887 = vunpack.c.l.b16 %v806
        %v888 = vunpack.c.h.b16 %v806
        %v889 = vunpack.c.l.b16 %v807
        %v890 = vunpack.c.l.b16 %v808
        %v891 = vunpack.c.h.b16 %v808
        %v892 = vunpack.c.l.b16 %v809
        %v893 = vunpack.c.l.b16 %v810
        %v894 = vunpack.c.h.b16 %v810
        %v895 = vunpack.c.l.b16 %v811
        %v896 = vunpack.c.l.b16 %v812
        %v897 = vunpack.c.h.b16 %v812
        %v898 = vunpack.c.l.b16 %v813
        %v899 = vunpack.c.l.b16 %v814
        %v900 = vunpack.c.h.b16 %v814
        %v901 = vunpack.c.l.b16 %v815
        %v902 = vunpack.c.l.b16 %v816
        %v903 = vunpack.c.h.b16 %v816
        %v904 = vunpack.c.l.b16 %v817
        %v905 = vunpack.c.l.b16 %v818
        %v906 = vunpack.c.h.b16 %v818
        %v907 = vunpack.c.l.b16 %v819
        %v908 = vunpack.c.l.b16 %v820
        %v909 = vunpack.c.h.b16 %v820
        %v910 = vunpack.c.l.b16 %v821
        %v911 = vunpack.c.l.b16 %v822
        %v912 = vunpack.c.h.b16 %v822
        %v913 = vunpack.c.l.b16 %v823
        %v914 = vunpack.c.l.b16 %v824
        %v915 = vunpack.c.h.b16 %v824
        %v916 = vunpack.c.l.b16 %v825
        %v917 = vunpack.c.l.b16 %v826
        %v918 = vunpack.c.h.b16 %v826
        %v919 = vunpack.c.l.b16 %v827
        %v920 = vunpack.c.l.b16 %v828
        %v921 = vunpack.c.h.b16 %v828
        %v922 = vunpack.c.l.b16 %v829
        %v923 = vunpack.c.l.b16 %v830
        %v924 = vunpack.c.h.b16 %v830
        %v925 = vunpack.c.l.b16 %v831
        %v926 = vunpack.c.l.b16 %v832
        %v927 = vunpack.c.h.b16 %v832
        %v928 = vunpack.c.l.b16 %v833
        %v929 = vunpack.c.l.b16 %v834
        %v930 = vunpack.c.h.b16 %v834
        %v931 = vunpack.c.l.b16 %v835
        %v932 = vunpack.c.l.b16 %v836
        %v933 = vunpack.c.h.b16 %v836
        %v934 = vunpack.c.l.b16 %v837
        %v935 = vpack.c.b16 %v890, %v887
        %v936 = vpack.c.b16 %v891, %v888
        %v937 = vpack.c.b16 %v892, %v889
        %v938 = vpack.c.b16 %v896, %v893
        %v939 = vpack.c.b16 %v897, %v894
        %v940 = vpack.c.b16 %v898, %v895
        %v941 = vpack.c.b16 %v902, %v899
        %v942 = vpack.c.b16 %v903, %v900
        %v943 = vpack.c.b16 %v904, %v901
        %v944 = vpack.c.b16 %v908, %v905
        %v945 = vpack.c.b16 %v909, %v906
        %v946 = vpack.c.b16 %v910, %v907
        %v947 = vpack.c.b16 %v914, %v911
        %v948 = vpack.c.b16 %v915, %v912
        %v949 = vpack.c.b16 %v916, %v913
        %v950 = vpack.c.b16 %v920, %v917
        %v951 = vpack.c.b16 %v921, %v918
        %v952 = vpack.c.b16 %v922, %v919
        %v953 = vpack.c.b16 %v926, %v923
        %v954 = vpack.c.b16 %v927, %v924
        %v955 = vpack.c.b16 %v928, %v925
        %v956 = vpack.c.b16 %v932, %v929
        %v957 = vpack.c.b16 %v933, %v930
        %v958 = vpack.c.b16 %v934, %v931
        %983 = vmatprep.subr.bf16.mxu0 %v936
        %984 = vmatpush1.bf16.msra.mxu0 %v935
        %985 = vmatprep.subr.bf16.mxu0 %v939
        %986 = vmatpush1.bf16.msra.mxu0 %v938
        %987 = vmatprep.subr.bf16.mxu0 %v942
        %988 = vmatpush1.bf16.msra.mxu0 %v941
        %989 = vmatprep.subr.bf16.mxu0 %v945
        %990 = vmatpush1.bf16.msra.mxu0 %v944
        %991 = vmatprep.subr.bf16.mxu0 %v948
        %992 = vmatpush1.bf16.msra.mxu0 %v947
        %993 = vmatprep.subr.bf16.mxu0 %v951
        %994 = vmatpush1.bf16.msra.mxu0 %v950
        %995 = vmatprep.subr.bf16.mxu0 %v954
        %996 = vmatpush1.bf16.msra.mxu0 %v953
        %997 = vmatprep.subr.bf16.mxu0 %v957
        %998 = vmatpush1.bf16.msra.mxu0 %v956
        %999 = vmatprep.subr.bf16.mxu0 0
        %1000 = vmatpush1.bf16.msra.mxu0 0
        %1001 = vmatprep.subr.bf16.mxu0 0
        %1002 = vmatpush1.bf16.msra.mxu0 0
        %1003 = vmatprep.subr.bf16.mxu0 0
        %1004 = vmatpush1.bf16.msra.mxu0 0
        %1005 = vmatprep.subr.bf16.mxu0 0
        %1006 = vmatpush1.bf16.msra.mxu0 0
        %1007 = vmatprep.subr.bf16.mxu0 0
        %1008 = vmatpush1.bf16.msra.mxu0 0
        %1009 = vmatprep.subr.bf16.mxu0 0
        %1010 = vmatpush1.bf16.msra.mxu0 0
        %1011 = vmatprep.subr.bf16.mxu0 0
        %1012 = vmatpush1.bf16.msra.mxu0 0
        %1013 = vmatprep.subr.bf16.mxu0 0
        %1014 = vmatpush1.bf16.msra.mxu0 0
        %1015 = vmatprep.mubr.bf16.mxu0 0
        %1016 = vmatmul.mubr.bf16.gmra.mrb[0].mxu0 %v805
        %v1017 = vpop.f32.mrb[0].mxu0
        %v1018 = vadd.f32 %v843, %v1017
        %v1019 = vpop.f32.mrb[0].mxu0
        %v1020 = vadd.f32 %v847, %v1019
        %v1021 = vpop.f32.mrb[0].mxu0
        %v1022 = vpop.f32.mrb[0].mxu0
        %1023 = vdwg.mxu0
        %1024 = vmatprep.subr.bf16.mxu0 0
        %1025 = vmatpush1.bf16.msra.mxu0 %v937
        %1026 = vmatprep.subr.bf16.mxu0 0
        %1027 = vmatpush1.bf16.msra.mxu0 %v940
        %1028 = vmatprep.subr.bf16.mxu0 0
        %1029 = vmatpush1.bf16.msra.mxu0 %v943
        %1030 = vmatprep.subr.bf16.mxu0 0
        %1031 = vmatpush1.bf16.msra.mxu0 %v946
        %1032 = vmatprep.subr.bf16.mxu0 0
        %1033 = vmatpush1.bf16.msra.mxu0 %v949
        %1034 = vmatprep.subr.bf16.mxu0 0
        %1035 = vmatpush1.bf16.msra.mxu0 %v952
        %1036 = vmatprep.subr.bf16.mxu0 0
        %1037 = vmatpush1.bf16.msra.mxu0 %v955
        %1038 = vmatprep.subr.bf16.mxu0 0
        %1039 = vmatpush1.bf16.msra.mxu0 %v958
        %1040 = vmatprep.subr.bf16.mxu0 0
        %1041 = vmatpush1.bf16.msra.mxu0 0
        %1042 = vmatprep.subr.bf16.mxu0 0
        %1043 = vmatpush1.bf16.msra.mxu0 0
        %1044 = vmatprep.subr.bf16.mxu0 0
        %1045 = vmatpush1.bf16.msra.mxu0 0
        %1046 = vmatprep.subr.bf16.mxu0 0
        %1047 = vmatpush1.bf16.msra.mxu0 0
        %1048 = vmatprep.subr.bf16.mxu0 0
        %1049 = vmatpush1.bf16.msra.mxu0 0
        %1050 = vmatprep.subr.bf16.mxu0 0
        %1051 = vmatpush1.bf16.msra.mxu0 0
        %1052 = vmatprep.subr.bf16.mxu0 0
        %1053 = vmatpush1.bf16.msra.mxu0 0
        %1054 = vmatprep.subr.bf16.mxu0 0
        %1055 = vmatpush1.bf16.msra.mxu0 0
        %1056 = vmatprep.mubr.bf16.mxu0 0
        %1057 = vmatmul.mubr.bf16.gmra.mrb[0].mxu0 %v805
        %v1058 = vpop.f32.mrb[0].mxu0
        %v1059 = vadd.f32 %v851, %v1058
        %v1060 = vpop.f32.mrb[0].mxu0
        %v1061 = vpop.f32.mrb[0].mxu0
        %v1062 = vpop.f32.mrb[0].mxu0
        %1063 = vdwg.mxu0
        %1065 = vrot.lane.b32.xlu0 %v1018, 96
        %v1066 = vpop.permute.xlu0 %1065
        %1068 = vrot.lane.b32.xlu0 %v1018, 64
        %v1069 = vpop.permute.xlu0 %1068
        %1071 = vrot.lane.b32.xlu0 %v1018, 32
        %v1072 = vpop.permute.xlu0 %1071
        %1075 = vrot.lane.b32.xlu0 %v1020, 96
        %v1076 = vpop.permute.xlu0 %1075
        %1078 = vrot.lane.b32.xlu0 %v1020, 64
        %v1079 = vpop.permute.xlu0 %1078
        %1081 = vrot.lane.b32.xlu0 %v1020, 32
        %v1082 = vpop.permute.xlu0 %1081
        %1085 = vrot.lane.b32.xlu0 %v1059, 96
        %v1086 = vpop.permute.xlu0 %1085
        %1088 = vrot.lane.b32.xlu0 %v1059, 64
        %v1089 = vpop.permute.xlu0 %1088
        %1091 = vrot.lane.b32.xlu0 %v1059, 32
        %v1092 = vpop.permute.xlu0 %1091
        %v1094 = vpack.c.bf16 %v1018, %v1018
        %v1095 = vpack.c.bf16 %v1066, %v1066
        %v1096 = vpack.c.bf16 %v1069, %v1069
        %v1097 = vpack.c.bf16 %v1072, %v1072
        %v1098 = vpack.c.bf16 %v1020, %v1020
        %v1099 = vpack.c.bf16 %v1076, %v1076
        %v1100 = vpack.c.bf16 %v1079, %v1079
        %v1101 = vpack.c.bf16 %v1082, %v1082
        %vm1102 = vcmask 261120
        %v1104 = vsel %vm1102, %v1094, 0
        %v1107 = vsel %vm1102, %v1098, 0
        %1109 = vmatprep.subr.bf16.mxu0 0
        %1110 = vmatpush1.bf16.xpose.msra.mxu0 %v1107
        %1111 = vmatprep.subr.bf16.mxu0 0
        %1112 = vmatpush1.bf16.xpose.msra.mxu0 0
        %1113 = vmatprep.subr.bf16.mxu0 0
        %1114 = vmatpush1.bf16.xpose.msra.mxu0 0
        %1115 = vmatprep.subr.bf16.mxu0 0
        %1116 = vmatpush1.bf16.xpose.msra.mxu0 0
        %1117 = vmatprep.subr.bf16.mxu0 0
        %1118 = vmatpush1.bf16.xpose.msra.mxu0 0
        %1119 = vmatprep.subr.bf16.mxu0 0
        %1120 = vmatpush1.bf16.xpose.msra.mxu0 0
        %1121 = vmatprep.subr.bf16.mxu0 0
        %1122 = vmatpush1.bf16.xpose.msra.mxu0 0
        %1123 = vmatprep.subr.bf16.mxu0 0
        %1124 = vmatpush1.bf16.xpose.msra.mxu0 0
        %1125 = vmatprep.subr.bf16.mxu0 0
        %1126 = vmatpush1.bf16.xpose.msra.mxu0 0
        %1127 = vmatprep.subr.bf16.mxu0 0
        %1128 = vmatpush1.bf16.xpose.msra.mxu0 0
        %1129 = vmatprep.subr.bf16.mxu0 0
        %1130 = vmatpush1.bf16.xpose.msra.mxu0 0
        %1131 = vmatprep.subr.bf16.mxu0 0
        %1132 = vmatpush1.bf16.xpose.msra.mxu0 0
        %1133 = vmatprep.subr.bf16.mxu0 0
        %1134 = vmatpush1.bf16.xpose.msra.mxu0 0
        %1135 = vmatprep.subr.bf16.mxu0 0
        %1136 = vmatpush1.bf16.xpose.msra.mxu0 0
        %1137 = vmatprep.subr.bf16.mxu0 0
        %1138 = vmatpush1.bf16.xpose.msra.mxu0 0
        %1139 = vmatprep.subr.bf16.mxu0 0
        %1140 = vmatpush1.bf16.xpose.msra.mxu0 0
        %1141 = vmatprep.mubr.bf16.mxu0 0
        %1142 = vmatmul.mubr.bf16.gmra.mrb[0].mxu0 %v1104
        %v1143 = vpop.f32.mrb[0].mxu0
        %v1144 = vadd.f32 0.0, %v1143
        %v1145 = vpop.f32.mrb[0].mxu0
        %v1146 = vpop.f32.mrb[0].mxu0
        %v1147 = vpop.f32.mrb[0].mxu0
        %1148 = vdwg.mxu0
        %v1150 = vsel %vm1102, %v1095, 0
        %v1153 = vsel %vm1102, %v1099, 0
        %1155 = vmatprep.subr.bf16.mxu0 0
        %1156 = vmatpush1.bf16.xpose.msra.mxu0 %v1153
        %1157 = vmatprep.subr.bf16.mxu0 0
        %1158 = vmatpush1.bf16.xpose.msra.mxu0 0
        %1159 = vmatprep.subr.bf16.mxu0 0
        %1160 = vmatpush1.bf16.xpose.msra.mxu0 0
        %1161 = vmatprep.subr.bf16.mxu0 0
        %1162 = vmatpush1.bf16.xpose.msra.mxu0 0
        %1163 = vmatprep.subr.bf16.mxu0 0
        %1164 = vmatpush1.bf16.xpose.msra.mxu0 0
        %1165 = vmatprep.subr.bf16.mxu0 0
        %1166 = vmatpush1.bf16.xpose.msra.mxu0 0
        %1167 = vmatprep.subr.bf16.mxu0 0
        %1168 = vmatpush1.bf16.xpose.msra.mxu0 0
        %1169 = vmatprep.subr.bf16.mxu0 0
        %1170 = vmatpush1.bf16.xpose.msra.mxu0 0
        %1171 = vmatprep.subr.bf16.mxu0 0
        %1172 = vmatpush1.bf16.xpose.msra.mxu0 0
        %1173 = vmatprep.subr.bf16.mxu0 0
        %1174 = vmatpush1.bf16.xpose.msra.mxu0 0
        %1175 = vmatprep.subr.bf16.mxu0 0
        %1176 = vmatpush1.bf16.xpose.msra.mxu0 0
        %1177 = vmatprep.subr.bf16.mxu0 0
        %1178 = vmatpush1.bf16.xpose.msra.mxu0 0
        %1179 = vmatprep.subr.bf16.mxu0 0
        %1180 = vmatpush1.bf16.xpose.msra.mxu0 0
        %1181 = vmatprep.subr.bf16.mxu0 0
        %1182 = vmatpush1.bf16.xpose.msra.mxu0 0
        %1183 = vmatprep.subr.bf16.mxu0 0
        %1184 = vmatpush1.bf16.xpose.msra.mxu0 0
        %1185 = vmatprep.subr.bf16.mxu0 0
        %1186 = vmatpush1.bf16.xpose.msra.mxu0 0
        %1187 = vmatprep.mubr.bf16.mxu0 0
        %1188 = vmatmul.mubr.bf16.gmra.mrb[0].mxu0 %v1150
        %v1189 = vpop.f32.mrb[0].mxu0
        %v1190 = vadd.f32 0.0, %v1189
        %v1191 = vpop.f32.mrb[0].mxu0
        %v1192 = vpop.f32.mrb[0].mxu0
        %v1193 = vpop.f32.mrb[0].mxu0
        %1194 = vdwg.mxu0
        %v1196 = vsel %vm1102, %v1096, 0
        %v1199 = vsel %vm1102, %v1100, 0
        %1201 = vmatprep.subr.bf16.mxu0 0
        %1202 = vmatpush1.bf16.xpose.msra.mxu0 %v1199
        %1203 = vmatprep.subr.bf16.mxu0 0
        %1204 = vmatpush1.bf16.xpose.msra.mxu0 0
        %1205 = vmatprep.subr.bf16.mxu0 0
        %1206 = vmatpush1.bf16.xpose.msra.mxu0 0
        %1207 = vmatprep.subr.bf16.mxu0 0
        %1208 = vmatpush1.bf16.xpose.msra.mxu0 0
        %1209 = vmatprep.subr.bf16.mxu0 0
        %1210 = vmatpush1.bf16.xpose.msra.mxu0 0
        %1211 = vmatprep.subr.bf16.mxu0 0
        %1212 = vmatpush1.bf16.xpose.msra.mxu0 0
        %1213 = vmatprep.subr.bf16.mxu0 0
        %1214 = vmatpush1.bf16.xpose.msra.mxu0 0
        %1215 = vmatprep.subr.bf16.mxu0 0
        %1216 = vmatpush1.bf16.xpose.msra.mxu0 0
        %1217 = vmatprep.subr.bf16.mxu0 0
        %1218 = vmatpush1.bf16.xpose.msra.mxu0 0
        %1219 = vmatprep.subr.bf16.mxu0 0
        %1220 = vmatpush1.bf16.xpose.msra.mxu0 0
        %1221 = vmatprep.subr.bf16.mxu0 0
        %1222 = vmatpush1.bf16.xpose.msra.mxu0 0
        %1223 = vmatprep.subr.bf16.mxu0 0
        %1224 = vmatpush1.bf16.xpose.msra.mxu0 0
        %1225 = vmatprep.subr.bf16.mxu0 0
        %1226 = vmatpush1.bf16.xpose.msra.mxu0 0
        %1227 = vmatprep.subr.bf16.mxu0 0
        %1228 = vmatpush1.bf16.xpose.msra.mxu0 0
        %1229 = vmatprep.subr.bf16.mxu0 0
        %1230 = vmatpush1.bf16.xpose.msra.mxu0 0
        %1231 = vmatprep.subr.bf16.mxu0 0
        %1232 = vmatpush1.bf16.xpose.msra.mxu0 0
        %1233 = vmatprep.mubr.bf16.mxu0 0
        %1234 = vmatmul.mubr.bf16.gmra.mrb[0].mxu0 %v1196
        %v1235 = vpop.f32.mrb[0].mxu0
        %v1236 = vadd.f32 0.0, %v1235
        %v1237 = vpop.f32.mrb[0].mxu0
        %v1238 = vpop.f32.mrb[0].mxu0
        %v1239 = vpop.f32.mrb[0].mxu0
        %1240 = vdwg.mxu0
        %v1242 = vsel %vm1102, %v1097, 0
        %v1245 = vsel %vm1102, %v1101, 0
        %1247 = vmatprep.subr.bf16.mxu0 0
        %1248 = vmatpush1.bf16.xpose.msra.mxu0 %v1245
        %1249 = vmatprep.subr.bf16.mxu0 0
        %1250 = vmatpush1.bf16.xpose.msra.mxu0 0
        %1251 = vmatprep.subr.bf16.mxu0 0
        %1252 = vmatpush1.bf16.xpose.msra.mxu0 0
        %1253 = vmatprep.subr.bf16.mxu0 0
        %1254 = vmatpush1.bf16.xpose.msra.mxu0 0
        %1255 = vmatprep.subr.bf16.mxu0 0
        %1256 = vmatpush1.bf16.xpose.msra.mxu0 0
        %1257 = vmatprep.subr.bf16.mxu0 0
        %1258 = vmatpush1.bf16.xpose.msra.mxu0 0
        %1259 = vmatprep.subr.bf16.mxu0 0
        %1260 = vmatpush1.bf16.xpose.msra.mxu0 0
        %1261 = vmatprep.subr.bf16.mxu0 0
        %1262 = vmatpush1.bf16.xpose.msra.mxu0 0
        %1263 = vmatprep.subr.bf16.mxu0 0
        %1264 = vmatpush1.bf16.xpose.msra.mxu0 0
        %1265 = vmatprep.subr.bf16.mxu0 0
        %1266 = vmatpush1.bf16.xpose.msra.mxu0 0
        %1267 = vmatprep.subr.bf16.mxu0 0
        %1268 = vmatpush1.bf16.xpose.msra.mxu0 0
        %1269 = vmatprep.subr.bf16.mxu0 0
        %1270 = vmatpush1.bf16.xpose.msra.mxu0 0
        %1271 = vmatprep.subr.bf16.mxu0 0
        %1272 = vmatpush1.bf16.xpose.msra.mxu0 0
        %1273 = vmatprep.subr.bf16.mxu0 0
        %1274 = vmatpush1.bf16.xpose.msra.mxu0 0
        %1275 = vmatprep.subr.bf16.mxu0 0
        %1276 = vmatpush1.bf16.xpose.msra.mxu0 0
        %1277 = vmatprep.subr.bf16.mxu0 0
        %1278 = vmatpush1.bf16.xpose.msra.mxu0 0
        %1279 = vmatprep.mubr.bf16.mxu0 0
        %1280 = vmatmul.mubr.bf16.gmra.mrb[0].mxu0 %v1242
        %v1281 = vpop.f32.mrb[0].mxu0
        %v1282 = vadd.f32 0.0, %v1281
        %v1283 = vpop.f32.mrb[0].mxu0
        %v1284 = vpop.f32.mrb[0].mxu0
        %v1285 = vpop.f32.mrb[0].mxu0
        %1286 = vdwg.mxu0
        %v1287 = vmul.f32 %v1144, 0.17677669
        %v1288 = vmul.f32 %v1190, 0.17677669
        %v1289 = vmul.f32 %v1236, 0.17677669
        %v1290 = vmul.f32 %v1282, 0.17677669
        %v1291 = vld [vmem:[#allocation3] sm:$0xff]
        %v1292 = vadd.f32 %v1287, %v1291
        %v1293 = vadd.f32 %v1288, %v1291
        %v1294 = vadd.f32 %v1289, %v1291
        %v1295 = vadd.f32 %v1290, %v1291
        %vm1296 = vcmask 64512
        %v1297 = vsel %vm1296, %v1292, -inf
        %1298 = vmax.xlane.f32.xlu0 %v1297
        %v1299 = vpop.xlane.xlu0 %1298
        %v1300 = vsel %vm1296, %v1293, -inf
        %1301 = vmax.xlane.f32.xlu0 %v1300
        %v1302 = vpop.xlane.xlu0 %1301
        %v1303 = vsel %vm1296, %v1294, -inf
        %1304 = vmax.xlane.f32.xlu0 %v1303
        %v1305 = vpop.xlane.xlu0 %1304
        %v1306 = vsel %vm1296, %v1295, -inf
        %1307 = vmax.xlane.f32.xlu0 %v1306
        %v1308 = vpop.xlane.xlu0 %1307
        %v1309 = vsub.f32 %v1292, %v1299
        %v1310 = vsub.f32 %v1293, %v1302
        %v1311 = vsub.f32 %v1294, %v1305
        %v1312 = vsub.f32 %v1295, %v1308
        %v1313 = vmul.f32 %v1309, 1.442695
        %v1314 = vpow.pop %v1313
        %v1315 = vmul.f32 %v1310, 1.442695
        %v1316 = vpow.pop %v1315
        %v1317 = vmul.f32 %v1311, 1.442695
        %v1318 = vpow.pop %v1317
        %v1319 = vmul.f32 %v1312, 1.442695
        %v1320 = vpow.pop %v1319
        %v1321 = vsel %vm1296, %v1314, 0.0
        %1322 = vadd.xlane.f32.xlu0 %v1321
        %v1323 = vpop.xlane.xlu0 %1322
        %v1324 = vsel %vm1296, %v1316, 0.0
        %1325 = vadd.xlane.f32.xlu0 %v1324
        %v1326 = vpop.xlane.xlu0 %1325
        %v1327 = vsel %vm1296, %v1318, 0.0
        %1328 = vadd.xlane.f32.xlu0 %v1327
        %v1329 = vpop.xlane.xlu0 %1328
        %v1330 = vsel %vm1296, %v1320, 0.0
        %1331 = vadd.xlane.f32.xlu0 %v1330
        %v1332 = vpop.xlane.xlu0 %1331
        %v1333 = vrcp.pop %v1323
        %v1334 = vrcp.pop %v1326
        %v1335 = vrcp.pop %v1329
        %v1336 = vrcp.pop %v1332
        %v1337 = vmul.f32 %v1314, %v1333
        %v1338 = vmul.f32 %v1316, %v1334
        %v1339 = vmul.f32 %v1318, %v1335
        %v1340 = vmul.f32 %v1320, %v1336
        %v1341 = vpack.c.bf16 %v1337, %v1337
        %v1342 = vpack.c.bf16 %v1338, %v1338
        %v1343 = vpack.c.bf16 %v1339, %v1339
        %v1344 = vpack.c.bf16 %v1340, %v1340
        %v1345 = vpack.c.bf16 %v1059, %v1059
        %v1346 = vpack.c.bf16 %v1086, %v1086
        %v1347 = vpack.c.bf16 %v1089, %v1089
        %v1348 = vpack.c.bf16 %v1092, %v1092
        %v1350 = vsel %vm1296, %v1341, 0
        %vm1352 = vcmask 1043456
        %v1354 = vsel %vm1352, %v1345, 0
        %1356 = vmatprep.subr.bf16.mxu0 0
        %1357 = vmatpush1.bf16.msra.mxu0 %v1354
        %1358 = vmatprep.subr.bf16.mxu0 0
        %1359 = vmatpush1.bf16.msra.mxu0 0
        %1360 = vmatprep.subr.bf16.mxu0 0
        %1361 = vmatpush1.bf16.msra.mxu0 0
        %1362 = vmatprep.subr.bf16.mxu0 0
        %1363 = vmatpush1.bf16.msra.mxu0 0
        %1364 = vmatprep.subr.bf16.mxu0 0
        %1365 = vmatpush1.bf16.msra.mxu0 0
        %1366 = vmatprep.subr.bf16.mxu0 0
        %1367 = vmatpush1.bf16.msra.mxu0 0
        %1368 = vmatprep.subr.bf16.mxu0 0
        %1369 = vmatpush1.bf16.msra.mxu0 0
        %1370 = vmatprep.subr.bf16.mxu0 0
        %1371 = vmatpush1.bf16.msra.mxu0 0
        %1372 = vmatprep.subr.bf16.mxu0 0
        %1373 = vmatpush1.bf16.msra.mxu0 0
        %1374 = vmatprep.subr.bf16.mxu0 0
        %1375 = vmatpush1.bf16.msra.mxu0 0
        %1376 = vmatprep.subr.bf16.mxu0 0
        %1377 = vmatpush1.bf16.msra.mxu0 0
        %1378 = vmatprep.subr.bf16.mxu0 0
        %1379 = vmatpush1.bf16.msra.mxu0 0
        %1380 = vmatprep.subr.bf16.mxu0 0
        %1381 = vmatpush1.bf16.msra.mxu0 0
        %1382 = vmatprep.subr.bf16.mxu0 0
        %1383 = vmatpush1.bf16.msra.mxu0 0
        %1384 = vmatprep.subr.bf16.mxu0 0
        %1385 = vmatpush1.bf16.msra.mxu0 0
        %1386 = vmatprep.subr.bf16.mxu0 0
        %1387 = vmatpush1.bf16.msra.mxu0 0
        %1388 = vmatprep.mubr.bf16.mxu0 0
        %1389 = vmatmul.mubr.bf16.gmra.mrb[0].mxu0 %v1350
        %v1390 = vpop.f32.mrb[0].mxu0
        %v1391 = vadd.f32 0.0, %v1390
        %v1392 = vpop.f32.mrb[0].mxu0
        %v1393 = vpop.f32.mrb[0].mxu0
        %v1394 = vpop.f32.mrb[0].mxu0
        %1395 = vdwg.mxu0
        %v1397 = vsel %vm1296, %v1342, 0
        %v1400 = vsel %vm1352, %v1346, 0
        %1402 = vmatprep.subr.bf16.mxu0 0
        %1403 = vmatpush1.bf16.msra.mxu0 %v1400
        %1404 = vmatprep.subr.bf16.mxu0 0
        %1405 = vmatpush1.bf16.msra.mxu0 0
        %1406 = vmatprep.subr.bf16.mxu0 0
        %1407 = vmatpush1.bf16.msra.mxu0 0
        %1408 = vmatprep.subr.bf16.mxu0 0
        %1409 = vmatpush1.bf16.msra.mxu0 0
        %1410 = vmatprep.subr.bf16.mxu0 0
        %1411 = vmatpush1.bf16.msra.mxu0 0
        %1412 = vmatprep.subr.bf16.mxu0 0
        %1413 = vmatpush1.bf16.msra.mxu0 0
        %1414 = vmatprep.subr.bf16.mxu0 0
        %1415 = vmatpush1.bf16.msra.mxu0 0
        %1416 = vmatprep.subr.bf16.mxu0 0
        %1417 = vmatpush1.bf16.msra.mxu0 0
        %1418 = vmatprep.subr.bf16.mxu0 0
        %1419 = vmatpush1.bf16.msra.mxu0 0
        %1420 = vmatprep.subr.bf16.mxu0 0
        %1421 = vmatpush1.bf16.msra.mxu0 0
        %1422 = vmatprep.subr.bf16.mxu0 0
        %1423 = vmatpush1.bf16.msra.mxu0 0
        %1424 = vmatprep.subr.bf16.mxu0 0
        %1425 = vmatpush1.bf16.msra.mxu0 0
        %1426 = vmatprep.subr.bf16.mxu0 0
        %1427 = vmatpush1.bf16.msra.mxu0 0
        %1428 = vmatprep.subr.bf16.mxu0 0
        %1429 = vmatpush1.bf16.msra.mxu0 0
        %1430 = vmatprep.subr.bf16.mxu0 0
        %1431 = vmatpush1.bf16.msra.mxu0 0
        %1432 = vmatprep.subr.bf16.mxu0 0
        %1433 = vmatpush1.bf16.msra.mxu0 0
        %1434 = vmatprep.mubr.bf16.mxu0 0
        %1435 = vmatmul.mubr.bf16.gmra.mrb[0].mxu0 %v1397
        %v1436 = vpop.f32.mrb[0].mxu0
        %v1437 = vadd.f32 0.0, %v1436
        %v1438 = vpop.f32.mrb[0].mxu0
        %v1439 = vpop.f32.mrb[0].mxu0
        %v1440 = vpop.f32.mrb[0].mxu0
        %1441 = vdwg.mxu0
        %v1443 = vsel %vm1296, %v1343, 0
        %v1446 = vsel %vm1352, %v1347, 0
        %1448 = vmatprep.subr.bf16.mxu0 0
        %1449 = vmatpush1.bf16.msra.mxu0 %v1446
        %1450 = vmatprep.subr.bf16.mxu0 0
        %1451 = vmatpush1.bf16.msra.mxu0 0
        %1452 = vmatprep.subr.bf16.mxu0 0
        %1453 = vmatpush1.bf16.msra.mxu0 0
        %1454 = vmatprep.subr.bf16.mxu0 0
        %1455 = vmatpush1.bf16.msra.mxu0 0
        %1456 = vmatprep.subr.bf16.mxu0 0
        %1457 = vmatpush1.bf16.msra.mxu0 0
        %1458 = vmatprep.subr.bf16.mxu0 0
        %1459 = vmatpush1.bf16.msra.mxu0 0
        %1460 = vmatprep.subr.bf16.mxu0 0
        %1461 = vmatpush1.bf16.msra.mxu0 0
        %1462 = vmatprep.subr.bf16.mxu0 0
        %1463 = vmatpush1.bf16.msra.mxu0 0
        %1464 = vmatprep.subr.bf16.mxu0 0
        %1465 = vmatpush1.bf16.msra.mxu0 0
        %1466 = vmatprep.subr.bf16.mxu0 0
        %1467 = vmatpush1.bf16.msra.mxu0 0
        %1468 = vmatprep.subr.bf16.mxu0 0
        %1469 = vmatpush1.bf16.msra.mxu0 0
        %1470 = vmatprep.subr.bf16.mxu0 0
        %1471 = vmatpush1.bf16.msra.mxu0 0
        %1472 = vmatprep.subr.bf16.mxu0 0
        %1473 = vmatpush1.bf16.msra.mxu0 0
        %1474 = vmatprep.subr.bf16.mxu0 0
        %1475 = vmatpush1.bf16.msra.mxu0 0
        %1476 = vmatprep.subr.bf16.mxu0 0
        %1477 = vmatpush1.bf16.msra.mxu0 0
        %1478 = vmatprep.subr.bf16.mxu0 0
        %1479 = vmatpush1.bf16.msra.mxu0 0
        %1480 = vmatprep.mubr.bf16.mxu0 0
        %1481 = vmatmul.mubr.bf16.gmra.mrb[0].mxu0 %v1443
        %v1482 = vpop.f32.mrb[0].mxu0
        %v1483 = vadd.f32 0.0, %v1482
        %v1484 = vpop.f32.mrb[0].mxu0
        %v1485 = vpop.f32.mrb[0].mxu0
        %v1486 = vpop.f32.mrb[0].mxu0
        %1487 = vdwg.mxu0
        %v1489 = vsel %vm1296, %v1344, 0
        %v1492 = vsel %vm1352, %v1348, 0
        %1494 = vmatprep.subr.bf16.mxu0 0
        %1495 = vmatpush1.bf16.msra.mxu0 %v1492
        %1496 = vmatprep.subr.bf16.mxu0 0
        %1497 = vmatpush1.bf16.msra.mxu0 0
        %1498 = vmatprep.subr.bf16.mxu0 0
        %1499 = vmatpush1.bf16.msra.mxu0 0
        %1500 = vmatprep.subr.bf16.mxu0 0
        %1501 = vmatpush1.bf16.msra.mxu0 0
        %1502 = vmatprep.subr.bf16.mxu0 0
        %1503 = vmatpush1.bf16.msra.mxu0 0
        %1504 = vmatprep.subr.bf16.mxu0 0
        %1505 = vmatpush1.bf16.msra.mxu0 0
        %1506 = vmatprep.subr.bf16.mxu0 0
        %1507 = vmatpush1.bf16.msra.mxu0 0
        %1508 = vmatprep.subr.bf16.mxu0 0
        %1509 = vmatpush1.bf16.msra.mxu0 0
        %1510 = vmatprep.subr.bf16.mxu0 0
        %1511 = vmatpush1.bf16.msra.mxu0 0
        %1512 = vmatprep.subr.bf16.mxu0 0
        %1513 = vmatpush1.bf16.msra.mxu0 0
        %1514 = vmatprep.subr.bf16.mxu0 0
        %1515 = vmatpush1.bf16.msra.mxu0 0
        %1516 = vmatprep.subr.bf16.mxu0 0
        %1517 = vmatpush1.bf16.msra.mxu0 0
        %1518 = vmatprep.subr.bf16.mxu0 0
        %1519 = vmatpush1.bf16.msra.mxu0 0
        %1520 = vmatprep.subr.bf16.mxu0 0
        %1521 = vmatpush1.bf16.msra.mxu0 0
        %1522 = vmatprep.subr.bf16.mxu0 0
        %1523 = vmatpush1.bf16.msra.mxu0 0
        %1524 = vmatprep.subr.bf16.mxu0 0
        %1525 = vmatpush1.bf16.msra.mxu0 0
        %1526 = vmatprep.mubr.bf16.mxu0 0
        %1527 = vmatmul.mubr.bf16.gmra.mrb[0].mxu0 %v1489
        %v1528 = vpop.f32.mrb[0].mxu0
        %v1529 = vadd.f32 0.0, %v1528
        %v1530 = vpop.f32.mrb[0].mxu0
        %v1531 = vpop.f32.mrb[0].mxu0
        %v1532 = vpop.f32.mrb[0].mxu0
        %1533 = vdwg.mxu0
        %1535 = vrot.lane.b32.xlu0 %v1437, 32
        %v1536 = vpop.permute.xlu0 %1535
        %1539 = vrot.lane.b32.xlu0 %v1483, 64
        %v1540 = vpop.permute.xlu0 %1539
        %1543 = vrot.lane.b32.xlu0 %v1529, 96
        %v1544 = vpop.permute.xlu0 %1543
        %v1546 = vsel %vm1102, %v1391, %v1536
        %vm1547 = vcmask 523264
        %v1548 = vsel %vm1547, %v1546, %v1540
        %vm1549 = vcmask 785408
        %v1550 = vsel %vm1549, %v1548, %v1544
        %v1551 = vpack.c.bf16 %v1550, %v1550
        %v1552 = vld [vmem:[%s646] sm:$0xf]
        %v1553 = vld [vmem:[%s646 + $0x4] sm:$0xf]
        %v1554 = vld [vmem:[%s646 + $0x8] sm:$0xf]
        %v1555 = vld [vmem:[%s646 + $0xc] sm:$0xf]
        %v1556 = vld [vmem:[%s646 + $0x10] sm:$0xf]
        %v1557 = vld [vmem:[%s646 + $0x14] sm:$0xf]
        %v1558 = vld [vmem:[%s646 + $0x18] sm:$0xf]
        %v1559 = vld [vmem:[%s646 + $0x1c] sm:$0xf]
        %v1560 = vld [vmem:[%s646 + $0x20] sm:$0xf]
        %v1561 = vld [vmem:[%s646 + $0x24] sm:$0xf]
        %v1562 = vld [vmem:[%s646 + $0x28] sm:$0xf]
        %v1563 = vld [vmem:[%s646 + $0x2c] sm:$0xf]
        %v1564 = vld [vmem:[%s646 + $0x30] sm:$0xf]
        %v1565 = vld [vmem:[%s646 + $0x34] sm:$0xf]
        %v1566 = vld [vmem:[%s646 + $0x38] sm:$0xf]
        %v1567 = vld [vmem:[%s646 + $0x3c] sm:$0xf]
        %v1568 = vld [vmem:[%s770] sm:$0x1]
        %v1570 = vlaneseq
        %v1571 = vshrl.u32 %v1570, 7
        %v1572 = vsub.s32 0, %v1571
        %v1573 = vrot.slane %v1568, %v1572
        %v1591 = vunpack.c.l.b16 %v1552
        %v1592 = vunpack.c.l.b16 %v1553
        %v1593 = vunpack.c.l.b16 %v1554
        %v1594 = vunpack.c.l.b16 %v1555
        %v1595 = vunpack.c.l.b16 %v1556
        %v1596 = vunpack.c.l.b16 %v1557
        %v1597 = vunpack.c.l.b16 %v1558
        %v1598 = vunpack.c.l.b16 %v1559
        %v1599 = vunpack.c.l.b16 %v1560
        %v1600 = vunpack.c.l.b16 %v1561
        %v1601 = vunpack.c.l.b16 %v1562
        %v1602 = vunpack.c.l.b16 %v1563
        %v1603 = vunpack.c.l.b16 %v1564
        %v1604 = vunpack.c.l.b16 %v1565
        %v1605 = vunpack.c.l.b16 %v1566
        %v1606 = vunpack.c.l.b16 %v1567
        %v1607 = vpack.c.b16 %v1592, %v1591
        %v1608 = vpack.c.b16 %v1594, %v1593
        %v1609 = vpack.c.b16 %v1596, %v1595
        %v1610 = vpack.c.b16 %v1598, %v1597
        %v1611 = vpack.c.b16 %v1600, %v1599
        %v1612 = vpack.c.b16 %v1602, %v1601
        %v1613 = vpack.c.b16 %v1604, %v1603
        %v1614 = vpack.c.b16 %v1606, %v1605
        %1623 = vmatprep.subr.bf16.mxu0 0
        %1624 = vmatpush1.bf16.msra.mxu0 %v1607
        %1625 = vmatprep.subr.bf16.mxu0 0
        %1626 = vmatpush1.bf16.msra.mxu0 %v1608
        %1627 = vmatprep.subr.bf16.mxu0 0
        %1628 = vmatpush1.bf16.msra.mxu0 %v1609
        %1629 = vmatprep.subr.bf16.mxu0 0
        %1630 = vmatpush1.bf16.msra.mxu0 %v1610
        %1631 = vmatprep.subr.bf16.mxu0 0
        %1632 = vmatpush1.bf16.msra.mxu0 %v1611
        %1633 = vmatprep.subr.bf16.mxu0 0
        %1634 = vmatpush1.bf16.msra.mxu0 %v1612
        %1635 = vmatprep.subr.bf16.mxu0 0
        %1636 = vmatpush1.bf16.msra.mxu0 %v1613
        %1637 = vmatprep.subr.bf16.mxu0 0
        %1638 = vmatpush1.bf16.msra.mxu0 %v1614
        %1639 = vmatprep.subr.bf16.mxu0 0
        %1640 = vmatpush1.bf16.msra.mxu0 0
        %1641 = vmatprep.subr.bf16.mxu0 0
        %1642 = vmatpush1.bf16.msra.mxu0 0
        %1643 = vmatprep.subr.bf16.mxu0 0
        %1644 = vmatpush1.bf16.msra.mxu0 0
        %1645 = vmatprep.subr.bf16.mxu0 0
        %1646 = vmatpush1.bf16.msra.mxu0 0
        %1647 = vmatprep.subr.bf16.mxu0 0
        %1648 = vmatpush1.bf16.msra.mxu0 0
        %1649 = vmatprep.subr.bf16.mxu0 0
        %1650 = vmatpush1.bf16.msra.mxu0 0
        %1651 = vmatprep.subr.bf16.mxu0 0
        %1652 = vmatpush1.bf16.msra.mxu0 0
        %1653 = vmatprep.subr.bf16.mxu0 0
        %1654 = vmatpush1.bf16.msra.mxu0 0
        %1655 = vmatprep.mubr.bf16.mxu0 0
        %1656 = vmatmul.mubr.bf16.gmra.mrb[0].mxu0 %v1551
        %v1657 = vpop.f32.mrb[0].mxu0
        %v1658 = vadd.f32 %v1573, %v1657
        %v1659 = vpop.f32.mrb[0].mxu0
        %v1660 = vpop.f32.mrb[0].mxu0
        %v1661 = vpop.f32.mrb[0].mxu0
        %1662 = vdwg.mxu0
        %v1663 = vadd.f32 %v804, %v1658
        %v1664 = vld [vmem:[%s777] sm:$0x1]
        %v1665 = vld [vmem:[%s780] sm:$0x1]
        %1666 = vadd.xlane.f32.xlu0 %v1663
        %v1667 = vpop.xlane.xlu0 %1666
        %v1668 = vrcp.pop 128.0
        %v1669 = vmul.f32 %v1667, %v1668
        %v1670 = vsub.f32 %v1663, %v1669
        %v1671 = vmul.f32 %v1670, %v1670
        %1672 = vadd.xlane.f32.xlu0 %v1671
        %v1673 = vpop.xlane.xlu0 %1672
        %v1674 = vmul.f32 %v1673, %v1668
        %v1675 = vadd.f32 %v1674, 1e-05
        %v1676 = vrsqrt.pop %v1675
        %v1677 = vmul.f32 %v1670, %v1676
        %v1679 = vlaneseq
        %v1680 = vshrl.u32 %v1679, 7
        %v1681 = vsub.s32 0, %v1680
        %v1682 = vrot.slane %v1664, %v1681
        %v1684 = vmul.f32 %v1677, %v1682
        %v1686 = vlaneseq
        %v1687 = vshrl.u32 %v1686, 7
        %v1688 = vsub.s32 0, %v1687
        %v1689 = vrot.slane %v1665, %v1688
        %v1691 = vadd.f32 %v1684, %v1689
        %v1692 = vpack.c.bf16 %v1691, %v1691
        %v1693 = vld [vmem:[%s655] sm:$0xff]
        %v1694 = vld [vmem:[%s655 + $0x8] sm:$0xff]
        %v1695 = vld [vmem:[%s655 + $0x10] sm:$0xff]
        %v1696 = vld [vmem:[%s655 + $0x18] sm:$0xff]
        %v1697 = vld [vmem:[%s655 + $0x20] sm:$0xff]
        %v1698 = vld [vmem:[%s655 + $0x28] sm:$0xff]
        %v1699 = vld [vmem:[%s655 + $0x30] sm:$0xff]
        %v1700 = vld [vmem:[%s655 + $0x38] sm:$0xff]
        %v1701 = vld [vmem:[%s655 + $0x40] sm:$0xff]
        %v1702 = vld [vmem:[%s655 + $0x48] sm:$0xff]
        %v1703 = vld [vmem:[%s655 + $0x50] sm:$0xff]
        %v1704 = vld [vmem:[%s655 + $0x58] sm:$0xff]
        %v1705 = vld [vmem:[%s655 + $0x60] sm:$0xff]
        %v1706 = vld [vmem:[%s655 + $0x68] sm:$0xff]
        %v1707 = vld [vmem:[%s655 + $0x70] sm:$0xff]
        %v1708 = vld [vmem:[%s655 + $0x78] sm:$0xff]
        %v1709 = vld [vmem:[%s655 + $0x80] sm:$0xff]
        %v1710 = vld [vmem:[%s655 + $0x88] sm:$0xff]
        %v1711 = vld [vmem:[%s655 + $0x90] sm:$0xff]
        %v1712 = vld [vmem:[%s655 + $0x98] sm:$0xff]
        %v1713 = vld [vmem:[%s655 + $0xa0] sm:$0xff]
        %v1714 = vld [vmem:[%s655 + $0xa8] sm:$0xff]
        %v1715 = vld [vmem:[%s655 + $0xb0] sm:$0xff]
        %v1716 = vld [vmem:[%s655 + $0xb8] sm:$0xff]
        %v1717 = vld [vmem:[%s655 + $0xc0] sm:$0xff]
        %v1718 = vld [vmem:[%s655 + $0xc8] sm:$0xff]
        %v1719 = vld [vmem:[%s655 + $0xd0] sm:$0xff]
        %v1720 = vld [vmem:[%s655 + $0xd8] sm:$0xff]
        %v1721 = vld [vmem:[%s655 + $0xe0] sm:$0xff]
        %v1722 = vld [vmem:[%s655 + $0xe8] sm:$0xff]
        %v1723 = vld [vmem:[%s655 + $0xf0] sm:$0xff]
        %v1724 = vld [vmem:[%s655 + $0xf8] sm:$0xff]
        %v1725 = vld [vmem:[%s774] sm:$0xf]
        %v1727 = vlaneseq
        %v1728 = vshrl.u32 %v1727, 7
        %v1729 = vsub.s32 0, %v1728
        %v1730 = vrot.slane %v1725, %v1729
        %v1731 = vlaneseq
        %v1732 = vshrl.u32 %v1731, 7
        %v1733 = vsub.s32 1, %v1732
        %v1734 = vrot.slane %v1725, %v1733
        %v1735 = vlaneseq
        %v1736 = vshrl.u32 %v1735, 7
        %v1737 = vsub.s32 2, %v1736
        %v1738 = vrot.slane %v1725, %v1737
        %v1739 = vlaneseq
        %v1740 = vshrl.u32 %v1739, 7
        %v1741 = vsub.s32 3, %v1740
        %v1742 = vrot.slane %v1725, %v1741
        %v1779 = vunpack.c.l.b16 %v1693
        %v1780 = vunpack.c.h.b16 %v1693
        %v1781 = vunpack.c.l.b16 %v1694
        %v1782 = vunpack.c.h.b16 %v1694
        %v1783 = vunpack.c.l.b16 %v1695
        %v1784 = vunpack.c.h.b16 %v1695
        %v1785 = vunpack.c.l.b16 %v1696
        %v1786 = vunpack.c.h.b16 %v1696
        %v1787 = vunpack.c.l.b16 %v1697
        %v1788 = vunpack.c.h.b16 %v1697
        %v1789 = vunpack.c.l.b16 %v1698
        %v1790 = vunpack.c.h.b16 %v1698
        %v1791 = vunpack.c.l.b16 %v1699
        %v1792 = vunpack.c.h.b16 %v1699
        %v1793 = vunpack.c.l.b16 %v1700
        %v1794 = vunpack.c.h.b16 %v1700
        %v1795 = vunpack.c.l.b16 %v1701
        %v1796 = vunpack.c.h.b16 %v1701
        %v1797 = vunpack.c.l.b16 %v1702
        %v1798 = vunpack.c.h.b16 %v1702
        %v1799 = vunpack.c.l.b16 %v1703
        %v1800 = vunpack.c.h.b16 %v1703
        %v1801 = vunpack.c.l.b16 %v1704
        %v1802 = vunpack.c.h.b16 %v1704
        %v1803 = vunpack.c.l.b16 %v1705
        %v1804 = vunpack.c.h.b16 %v1705
        %v1805 = vunpack.c.l.b16 %v1706
        %v1806 = vunpack.c.h.b16 %v1706
        %v1807 = vunpack.c.l.b16 %v1707
        %v1808 = vunpack.c.h.b16 %v1707
        %v1809 = vunpack.c.l.b16 %v1708
        %v1810 = vunpack.c.h.b16 %v1708
        %v1811 = vunpack.c.l.b16 %v1709
        %v1812 = vunpack.c.h.b16 %v1709
        %v1813 = vunpack.c.l.b16 %v1710
        %v1814 = vunpack.c.h.b16 %v1710
        %v1815 = vunpack.c.l.b16 %v1711
        %v1816 = vunpack.c.h.b16 %v1711
        %v1817 = vunpack.c.l.b16 %v1712
        %v1818 = vunpack.c.h.b16 %v1712
        %v1819 = vunpack.c.l.b16 %v1713
        %v1820 = vunpack.c.h.b16 %v1713
        %v1821 = vunpack.c.l.b16 %v1714
        %v1822 = vunpack.c.h.b16 %v1714
        %v1823 = vunpack.c.l.b16 %v1715
        %v1824 = vunpack.c.h.b16 %v1715
        %v1825 = vunpack.c.l.b16 %v1716
        %v1826 = vunpack.c.h.b16 %v1716
        %v1827 = vunpack.c.l.b16 %v1717
        %v1828 = vunpack.c.h.b16 %v1717
        %v1829 = vunpack.c.l.b16 %v1718
        %v1830 = vunpack.c.h.b16 %v1718
        %v1831 = vunpack.c.l.b16 %v1719
        %v1832 = vunpack.c.h.b16 %v1719
        %v1833 = vunpack.c.l.b16 %v1720
        %v1834 = vunpack.c.h.b16 %v1720
        %v1835 = vunpack.c.l.b16 %v1721
        %v1836 = vunpack.c.h.b16 %v1721
        %v1837 = vunpack.c.l.b16 %v1722
        %v1838 = vunpack.c.h.b16 %v1722
        %v1839 = vunpack.c.l.b16 %v1723
        %v1840 = vunpack.c.h.b16 %v1723
        %v1841 = vunpack.c.l.b16 %v1724
        %v1842 = vunpack.c.h.b16 %v1724
        %v1843 = vpack.c.b16 %v1783, %v1779
        %v1844 = vpack.c.b16 %v1784, %v1780
        %v1845 = vpack.c.b16 %v1785, %v1781
        %v1846 = vpack.c.b16 %v1786, %v1782
        %v1847 = vpack.c.b16 %v1791, %v1787
        %v1848 = vpack.c.b16 %v1792, %v1788
        %v1849 = vpack.c.b16 %v1793, %v1789
        %v1850 = vpack.c.b16 %v1794, %v1790
        %v1851 = vpack.c.b16 %v1799, %v1795
        %v1852 = vpack.c.b16 %v1800, %v1796
        %v1853 = vpack.c.b16 %v1801, %v1797
        %v1854 = vpack.c.b16 %v1802, %v1798
        %v1855 = vpack.c.b16 %v1807, %v1803
        %v1856 = vpack.c.b16 %v1808, %v1804
        %v1857 = vpack.c.b16 %v1809, %v1805
        %v1858 = vpack.c.b16 %v1810, %v1806
        %v1859 = vpack.c.b16 %v1815, %v1811
        %v1860 = vpack.c.b16 %v1816, %v1812
        %v1861 = vpack.c.b16 %v1817, %v1813
        %v1862 = vpack.c.b16 %v1818, %v1814
        %v1863 = vpack.c.b16 %v1823, %v1819
        %v1864 = vpack.c.b16 %v1824, %v1820
        %v1865 = vpack.c.b16 %v1825, %v1821
        %v1866 = vpack.c.b16 %v1826, %v1822
        %v1867 = vpack.c.b16 %v1831, %v1827
        %v1868 = vpack.c.b16 %v1832, %v1828
        %v1869 = vpack.c.b16 %v1833, %v1829
        %v1870 = vpack.c.b16 %v1834, %v1830
        %v1871 = vpack.c.b16 %v1839, %v1835
        %v1872 = vpack.c.b16 %v1840, %v1836
        %v1873 = vpack.c.b16 %v1841, %v1837
        %v1874 = vpack.c.b16 %v1842, %v1838
        %1907 = vmatprep.subr.bf16.mxu0 %v1844
        %1908 = vmatpush1.bf16.msra.mxu0 %v1843
        %1909 = vmatprep.subr.bf16.mxu0 %v1848
        %1910 = vmatpush1.bf16.msra.mxu0 %v1847
        %1911 = vmatprep.subr.bf16.mxu0 %v1852
        %1912 = vmatpush1.bf16.msra.mxu0 %v1851
        %1913 = vmatprep.subr.bf16.mxu0 %v1856
        %1914 = vmatpush1.bf16.msra.mxu0 %v1855
        %1915 = vmatprep.subr.bf16.mxu0 %v1860
        %1916 = vmatpush1.bf16.msra.mxu0 %v1859
        %1917 = vmatprep.subr.bf16.mxu0 %v1864
        %1918 = vmatpush1.bf16.msra.mxu0 %v1863
        %1919 = vmatprep.subr.bf16.mxu0 %v1868
        %1920 = vmatpush1.bf16.msra.mxu0 %v1867
        %1921 = vmatprep.subr.bf16.mxu0 %v1872
        %1922 = vmatpush1.bf16.msra.mxu0 %v1871
        %1923 = vmatprep.subr.bf16.mxu0 0
        %1924 = vmatpush1.bf16.msra.mxu0 0
        %1925 = vmatprep.subr.bf16.mxu0 0
        %1926 = vmatpush1.bf16.msra.mxu0 0
        %1927 = vmatprep.subr.bf16.mxu0 0
        %1928 = vmatpush1.bf16.msra.mxu0 0
        %1929 = vmatprep.subr.bf16.mxu0 0
        %1930 = vmatpush1.bf16.msra.mxu0 0
        %1931 = vmatprep.subr.bf16.mxu0 0
        %1932 = vmatpush1.bf16.msra.mxu0 0
        %1933 = vmatprep.subr.bf16.mxu0 0
        %1934 = vmatpush1.bf16.msra.mxu0 0
        %1935 = vmatprep.subr.bf16.mxu0 0
        %1936 = vmatpush1.bf16.msra.mxu0 0
        %1937 = vmatprep.subr.bf16.mxu0 0
        %1938 = vmatpush1.bf16.msra.mxu0 0
        %1939 = vmatprep.mubr.bf16.mxu0 0
        %1940 = vmatmul.mubr.bf16.gmra.mrb[0].mxu0 %v1692
        %v1941 = vpop.f32.mrb[0].mxu0
        %v1942 = vadd.f32 %v1730, %v1941
        %v1943 = vpop.f32.mrb[0].mxu0
        %v1944 = vadd.f32 %v1734, %v1943
        %v1945 = vpop.f32.mrb[0].mxu0
        %v1946 = vpop.f32.mrb[0].mxu0
        %1947 = vdwg.mxu0
        %1948 = vmatprep.subr.bf16.mxu0 %v1846
        %1949 = vmatpush1.bf16.msra.mxu0 %v1845
        %1950 = vmatprep.subr.bf16.mxu0 %v1850
        %1951 = vmatpush1.bf16.msra.mxu0 %v1849
        %1952 = vmatprep.subr.bf16.mxu0 %v1854
        %1953 = vmatpush1.bf16.msra.mxu0 %v1853
        %1954 = vmatprep.subr.bf16.mxu0 %v1858
        %1955 = vmatpush1.bf16.msra.mxu0 %v1857
        %1956 = vmatprep.subr.bf16.mxu0 %v1862
        %1957 = vmatpush1.bf16.msra.mxu0 %v1861
        %1958 = vmatprep.subr.bf16.mxu0 %v1866
        %1959 = vmatpush1.bf16.msra.mxu0 %v1865
        %1960 = vmatprep.subr.bf16.mxu0 %v1870
        %1961 = vmatpush1.bf16.msra.mxu0 %v1869
        %1962 = vmatprep.subr.bf16.mxu0 %v1874
        %1963 = vmatpush1.bf16.msra.mxu0 %v1873
        %1964 = vmatprep.subr.bf16.mxu0 0
        %1965 = vmatpush1.bf16.msra.mxu0 0
        %1966 = vmatprep.subr.bf16.mxu0 0
        %1967 = vmatpush1.bf16.msra.mxu0 0
        %1968 = vmatprep.subr.bf16.mxu0 0
        %1969 = vmatpush1.bf16.msra.mxu0 0
        %1970 = vmatprep.subr.bf16.mxu0 0
        %1971 = vmatpush1.bf16.msra.mxu0 0
        %1972 = vmatprep.subr.bf16.mxu0 0
        %1973 = vmatpush1.bf16.msra.mxu0 0
        %1974 = vmatprep.subr.bf16.mxu0 0
        %1975 = vmatpush1.bf16.msra.mxu0 0
        %1976 = vmatprep.subr.bf16.mxu0 0
        %1977 = vmatpush1.bf16.msra.mxu0 0
        %1978 = vmatprep.subr.bf16.mxu0 0
        %1979 = vmatpush1.bf16.msra.mxu0 0
        %1980 = vmatprep.mubr.bf16.mxu0 0
        %1981 = vmatmul.mubr.bf16.gmra.mrb[0].mxu0 %v1692
        %v1982 = vpop.f32.mrb[0].mxu0
        %v1983 = vadd.f32 %v1738, %v1982
        %v1984 = vpop.f32.mrb[0].mxu0
        %v1985 = vadd.f32 %v1742, %v1984
        %v1986 = vpop.f32.mrb[0].mxu0
        %v1987 = vpop.f32.mrb[0].mxu0
        %1988 = vdwg.mxu0
        %v1989 = vmax.f32 %v1942, 0.0
        %v1990 = vmax.f32 %v1944, 0.0
        %v1991 = vmax.f32 %v1983, 0.0
        %v1992 = vmax.f32 %v1985, 0.0
        %v1993 = vpack.c.bf16 %v1989, %v1989
        %v1994 = vpack.c.bf16 %v1990, %v1990
        %v1995 = vpack.c.bf16 %v1991, %v1991
        %v1996 = vpack.c.bf16 %v1992, %v1992
        %v1997 = vld [vmem:[%s664] sm:$0xf]
        %v1998 = vld [vmem:[%s664 + $0x4] sm:$0xf]
        %v1999 = vld [vmem:[%s664 + $0x8] sm:$0xf]
        %v2000 = vld [vmem:[%s664 + $0xc] sm:$0xf]
        %v2001 = vld [vmem:[%s664 + $0x10] sm:$0xf]
        %v2002 = vld [vmem:[%s664 + $0x14] sm:$0xf]
        %v2003 = vld [vmem:[%s664 + $0x18] sm:$0xf]
        %v2004 = vld [vmem:[%s664 + $0x1c] sm:$0xf]
        %v2005 = vld [vmem:[%s664 + $0x20] sm:$0xf]
        %v2006 = vld [vmem:[%s664 + $0x24] sm:$0xf]
        %v2007 = vld [vmem:[%s664 + $0x28] sm:$0xf]
        %v2008 = vld [vmem:[%s664 + $0x2c] sm:$0xf]
        %v2009 = vld [vmem:[%s664 + $0x30] sm:$0xf]
        %v2010 = vld [vmem:[%s664 + $0x34] sm:$0xf]
        %v2011 = vld [vmem:[%s664 + $0x38] sm:$0xf]
        %v2012 = vld [vmem:[%s664 + $0x3c] sm:$0xf]
        %v2013 = vld [vmem:[%s664 + $0x40] sm:$0xf]
        %v2014 = vld [vmem:[%s664 + $0x44] sm:$0xf]
        %v2015 = vld [vmem:[%s664 + $0x48] sm:$0xf]
        %v2016 = vld [vmem:[%s664 + $0x4c] sm:$0xf]
        %v2017 = vld [vmem:[%s664 + $0x50] sm:$0xf]
        %v2018 = vld [vmem:[%s664 + $0x54] sm:$0xf]
        %v2019 = vld [vmem:[%s664 + $0x58] sm:$0xf]
        %v2020 = vld [vmem:[%s664 + $0x5c] sm:$0xf]
        %v2021 = vld [vmem:[%s664 + $0x60] sm:$0xf]
        %v2022 = vld [vmem:[%s664 + $0x64] sm:$0xf]
        %v2023 = vld [vmem:[%s664 + $0x68] sm:$0xf]
        %v2024 = vld [vmem:[%s664 + $0x6c] sm:$0xf]
        %v2025 = vld [vmem:[%s664 + $0x70] sm:$0xf]
        %v2026 = vld [vmem:[%s664 + $0x74] sm:$0xf]
        %v2027 = vld [vmem:[%s664 + $0x78] sm:$0xf]
        %v2028 = vld [vmem:[%s664 + $0x7c] sm:$0xf]
        %v2029 = vld [vmem:[%s664 + $0x80] sm:$0xf]
        %v2030 = vld [vmem:[%s664 + $0x84] sm:$0xf]
        %v2031 = vld [vmem:[%s664 + $0x88] sm:$0xf]
        %v2032 = vld [vmem:[%s664 + $0x8c] sm:$0xf]
        %v2033 = vld [vmem:[%s664 + $0x90] sm:$0xf]
        %v2034 = vld [vmem:[%s664 + $0x94] sm:$0xf]
        %v2035 = vld [vmem:[%s664 + $0x98] sm:$0xf]
        %v2036 = vld [vmem:[%s664 + $0x9c] sm:$0xf]
        %v2037 = vld [vmem:[%s664 + $0xa0] sm:$0xf]
        %v2038 = vld [vmem:[%s664 + $0xa4] sm:$0xf]
        %v2039 = vld [vmem:[%s664 + $0xa8] sm:$0xf]
        %v2040 = vld [vmem:[%s664 + $0xac] sm:$0xf]
        %v2041 = vld [vmem:[%s664 + $0xb0] sm:$0xf]
        %v2042 = vld [vmem:[%s664 + $0xb4] sm:$0xf]
        %v2043 = vld [vmem:[%s664 + $0xb8] sm:$0xf]
        %v2044 = vld [vmem:[%s664 + $0xbc] sm:$0xf]
        %v2045 = vld [vmem:[%s664 + $0xc0] sm:$0xf]
        %v2046 = vld [vmem:[%s664 + $0xc4] sm:$0xf]
        %v2047 = vld [vmem:[%s664 + $0xc8] sm:$0xf]
        %v2048 = vld [vmem:[%s664 + $0xcc] sm:$0xf]
        %v2049 = vld [vmem:[%s664 + $0xd0] sm:$0xf]
        %v2050 = vld [vmem:[%s664 + $0xd4] sm:$0xf]
        %v2051 = vld [vmem:[%s664 + $0xd8] sm:$0xf]
        %v2052 = vld [vmem:[%s664 + $0xdc] sm:$0xf]
        %v2053 = vld [vmem:[%s664 + $0xe0] sm:$0xf]
        %v2054 = vld [vmem:[%s664 + $0xe4] sm:$0xf]
        %v2055 = vld [vmem:[%s664 + $0xe8] sm:$0xf]
        %v2056 = vld [vmem:[%s664 + $0xec] sm:$0xf]
        %v2057 = vld [vmem:[%s664 + $0xf0] sm:$0xf]
        %v2058 = vld [vmem:[%s664 + $0xf4] sm:$0xf]
        %v2059 = vld [vmem:[%s664 + $0xf8] sm:$0xf]
        %v2060 = vld [vmem:[%s664 + $0xfc] sm:$0xf]
        %v2061 = vld [vmem:[%s672] sm:$0x1]
        %v2063 = vlaneseq
        %v2064 = vshrl.u32 %v2063, 7
        %v2065 = vsub.s32 0, %v2064
        %v2066 = vrot.slane %v2061, %v2065
        %v2132 = vunpack.c.l.b16 %v1997
        %v2133 = vunpack.c.l.b16 %v1998
        %v2134 = vunpack.c.l.b16 %v1999
        %v2135 = vunpack.c.l.b16 %v2000
        %v2136 = vunpack.c.l.b16 %v2001
        %v2137 = vunpack.c.l.b16 %v2002
        %v2138 = vunpack.c.l.b16 %v2003
        %v2139 = vunpack.c.l.b16 %v2004
        %v2140 = vunpack.c.l.b16 %v2005
        %v2141 = vunpack.c.l.b16 %v2006
        %v2142 = vunpack.c.l.b16 %v2007
        %v2143 = vunpack.c.l.b16 %v2008
        %v2144 = vunpack.c.l.b16 %v2009
        %v2145 = vunpack.c.l.b16 %v2010
        %v2146 = vunpack.c.l.b16 %v2011
        %v2147 = vunpack.c.l.b16 %v2012
        %v2148 = vunpack.c.l.b16 %v2013
        %v2149 = vunpack.c.l.b16 %v2014
        %v2150 = vunpack.c.l.b16 %v2015
        %v2151 = vunpack.c.l.b16 %v2016
        %v2152 = vunpack.c.l.b16 %v2017
        %v2153 = vunpack.c.l.b16 %v2018
        %v2154 = vunpack.c.l.b16 %v2019
        %v2155 = vunpack.c.l.b16 %v2020
        %v2156 = vunpack.c.l.b16 %v2021
        %v2157 = vunpack.c.l.b16 %v2022
        %v2158 = vunpack.c.l.b16 %v2023
        %v2159 = vunpack.c.l.b16 %v2024
        %v2160 = vunpack.c.l.b16 %v2025
        %v2161 = vunpack.c.l.b16 %v2026
        %v2162 = vunpack.c.l.b16 %v2027
        %v2163 = vunpack.c.l.b16 %v2028
        %v2164 = vunpack.c.l.b16 %v2029
        %v2165 = vunpack.c.l.b16 %v2030
        %v2166 = vunpack.c.l.b16 %v2031
        %v2167 = vunpack.c.l.b16 %v2032
        %v2168 = vunpack.c.l.b16 %v2033
        %v2169 = vunpack.c.l.b16 %v2034
        %v2170 = vunpack.c.l.b16 %v2035
        %v2171 = vunpack.c.l.b16 %v2036
        %v2172 = vunpack.c.l.b16 %v2037
        %v2173 = vunpack.c.l.b16 %v2038
        %v2174 = vunpack.c.l.b16 %v2039
        %v2175 = vunpack.c.l.b16 %v2040
        %v2176 = vunpack.c.l.b16 %v2041
        %v2177 = vunpack.c.l.b16 %v2042
        %v2178 = vunpack.c.l.b16 %v2043
        %v2179 = vunpack.c.l.b16 %v2044
        %v2180 = vunpack.c.l.b16 %v2045
        %v2181 = vunpack.c.l.b16 %v2046
        %v2182 = vunpack.c.l.b16 %v2047
        %v2183 = vunpack.c.l.b16 %v2048
        %v2184 = vunpack.c.l.b16 %v2049
        %v2185 = vunpack.c.l.b16 %v2050
        %v2186 = vunpack.c.l.b16 %v2051
        %v2187 = vunpack.c.l.b16 %v2052
        %v2188 = vunpack.c.l.b16 %v2053
        %v2189 = vunpack.c.l.b16 %v2054
        %v2190 = vunpack.c.l.b16 %v2055
        %v2191 = vunpack.c.l.b16 %v2056
        %v2192 = vunpack.c.l.b16 %v2057
        %v2193 = vunpack.c.l.b16 %v2058
        %v2194 = vunpack.c.l.b16 %v2059
        %v2195 = vunpack.c.l.b16 %v2060
        %v2196 = vpack.c.b16 %v2133, %v2132
        %v2197 = vpack.c.b16 %v2135, %v2134
        %v2198 = vpack.c.b16 %v2137, %v2136
        %v2199 = vpack.c.b16 %v2139, %v2138
        %v2200 = vpack.c.b16 %v2141, %v2140
        %v2201 = vpack.c.b16 %v2143, %v2142
        %v2202 = vpack.c.b16 %v2145, %v2144
        %v2203 = vpack.c.b16 %v2147, %v2146
        %v2204 = vpack.c.b16 %v2149, %v2148
        %v2205 = vpack.c.b16 %v2151, %v2150
        %v2206 = vpack.c.b16 %v2153, %v2152
        %v2207 = vpack.c.b16 %v2155, %v2154
        %v2208 = vpack.c.b16 %v2157, %v2156
        %v2209 = vpack.c.b16 %v2159, %v2158
        %v2210 = vpack.c.b16 %v2161, %v2160
        %v2211 = vpack.c.b16 %v2163, %v2162
        %v2212 = vpack.c.b16 %v2165, %v2164
        %v2213 = vpack.c.b16 %v2167, %v2166
        %v2214 = vpack.c.b16 %v2169, %v2168
        %v2215 = vpack.c.b16 %v2171, %v2170
        %v2216 = vpack.c.b16 %v2173, %v2172
        %v2217 = vpack.c.b16 %v2175, %v2174
        %v2218 = vpack.c.b16 %v2177, %v2176
        %v2219 = vpack.c.b16 %v2179, %v2178
        %v2220 = vpack.c.b16 %v2181, %v2180
        %v2221 = vpack.c.b16 %v2183, %v2182
        %v2222 = vpack.c.b16 %v2185, %v2184
        %v2223 = vpack.c.b16 %v2187, %v2186
        %v2224 = vpack.c.b16 %v2189, %v2188
        %v2225 = vpack.c.b16 %v2191, %v2190
        %v2226 = vpack.c.b16 %v2193, %v2192
        %v2227 = vpack.c.b16 %v2195, %v2194
        %2260 = vmatprep.subr.bf16.mxu0 0
        %2261 = vmatpush1.bf16.msra.mxu0 %v2196
        %2262 = vmatprep.subr.bf16.mxu0 0
        %2263 = vmatpush1.bf16.msra.mxu0 %v2197
        %2264 = vmatprep.subr.bf16.mxu0 0
        %2265 = vmatpush1.bf16.msra.mxu0 %v2198
        %2266 = vmatprep.subr.bf16.mxu0 0
        %2267 = vmatpush1.bf16.msra.mxu0 %v2199
        %2268 = vmatprep.subr.bf16.mxu0 0
        %2269 = vmatpush1.bf16.msra.mxu0 %v2200
        %2270 = vmatprep.subr.bf16.mxu0 0
        %2271 = vmatpush1.bf16.msra.mxu0 %v2201
        %2272 = vmatprep.subr.bf16.mxu0 0
        %2273 = vmatpush1.bf16.msra.mxu0 %v2202
        %2274 = vmatprep.subr.bf16.mxu0 0
        %2275 = vmatpush1.bf16.msra.mxu0 %v2203
        %2276 = vmatprep.subr.bf16.mxu0 0
        %2277 = vmatpush1.bf16.msra.mxu0 %v2204
        %2278 = vmatprep.subr.bf16.mxu0 0
        %2279 = vmatpush1.bf16.msra.mxu0 %v2205
        %2280 = vmatprep.subr.bf16.mxu0 0
        %2281 = vmatpush1.bf16.msra.mxu0 %v2206
        %2282 = vmatprep.subr.bf16.mxu0 0
        %2283 = vmatpush1.bf16.msra.mxu0 %v2207
        %2284 = vmatprep.subr.bf16.mxu0 0
        %2285 = vmatpush1.bf16.msra.mxu0 %v2208
        %2286 = vmatprep.subr.bf16.mxu0 0
        %2287 = vmatpush1.bf16.msra.mxu0 %v2209
        %2288 = vmatprep.subr.bf16.mxu0 0
        %2289 = vmatpush1.bf16.msra.mxu0 %v2210
        %2290 = vmatprep.subr.bf16.mxu0 0
        %2291 = vmatpush1.bf16.msra.mxu0 %v2211
        %2292 = vmatprep.mubr.bf16.mxu0 %v1994
        %2293 = vmatmul.mubr.bf16.gmra.mrb[0].mxu0 %v1993
        %v2294 = vpop.f32.mrb[0].mxu0
        %v2295 = vadd.f32 %v2066, %v2294
        %v2296 = vpop.f32.mrb[0].mxu0
        %v2297 = vpop.f32.mrb[0].mxu0
        %v2298 = vpop.f32.mrb[0].mxu0
        %2299 = vdwg.mxu0
        %2300 = vmatprep.subr.bf16.mxu0 0
        %2301 = vmatpush1.bf16.msra.mxu0 %v2212
        %2302 = vmatprep.subr.bf16.mxu0 0
        %2303 = vmatpush1.bf16.msra.mxu0 %v2213
        %2304 = vmatprep.subr.bf16.mxu0 0
        %2305 = vmatpush1.bf16.msra.mxu0 %v2214
        %2306 = vmatprep.subr.bf16.mxu0 0
        %2307 = vmatpush1.bf16.msra.mxu0 %v2215
        %2308 = vmatprep.subr.bf16.mxu0 0
        %2309 = vmatpush1.bf16.msra.mxu0 %v2216
        %2310 = vmatprep.subr.bf16.mxu0 0
        %2311 = vmatpush1.bf16.msra.mxu0 %v2217
        %2312 = vmatprep.subr.bf16.mxu0 0
        %2313 = vmatpush1.bf16.msra.mxu0 %v2218
        %2314 = vmatprep.subr.bf16.mxu0 0
        %2315 = vmatpush1.bf16.msra.mxu0 %v2219
        %2316 = vmatprep.subr.bf16.mxu0 0
        %2317 = vmatpush1.bf16.msra.mxu0 %v2220
        %2318 = vmatprep.subr.bf16.mxu0 0
        %2319 = vmatpush1.bf16.msra.mxu0 %v2221
        %2320 = vmatprep.subr.bf16.mxu0 0
        %2321 = vmatpush1.bf16.msra.mxu0 %v2222
        %2322 = vmatprep.subr.bf16.mxu0 0
        %2323 = vmatpush1.bf16.msra.mxu0 %v2223
        %2324 = vmatprep.subr.bf16.mxu0 0
        %2325 = vmatpush1.bf16.msra.mxu0 %v2224
        %2326 = vmatprep.subr.bf16.mxu0 0
        %2327 = vmatpush1.bf16.msra.mxu0 %v2225
        %2328 = vmatprep.subr.bf16.mxu0 0
        %2329 = vmatpush1.bf16.msra.mxu0 %v2226
        %2330 = vmatprep.subr.bf16.mxu0 0
        %2331 = vmatpush1.bf16.msra.mxu0 %v2227
        %2332 = vmatprep.mubr.bf16.mxu0 %v1996
        %2333 = vmatmul.mubr.bf16.gmra.mrb[0].mxu0 %v1995
        %v2334 = vpop.f32.mrb[0].mxu0
        %v2335 = vadd.f32 %v2295, %v2334
        %v2336 = vpop.f32.mrb[0].mxu0
        %v2337 = vpop.f32.mrb[0].mxu0
        %v2338 = vpop.f32.mrb[0].mxu0
        %2339 = vdwg.mxu0
        %v2340 = vadd.f32 %v1691, %v2335
        %v2341 = vld [vmem:[%s783] sm:$0x1]
        %v2342 = vld [vmem:[%s786] sm:$0x1]
        %2343 = vadd.xlane.f32.xlu0 %v2340
        %v2344 = vpop.xlane.xlu0 %2343
        %v2345 = vmul.f32 %v2344, %v1668
        %v2346 = vsub.f32 %v2340, %v2345
        %v2347 = vmul.f32 %v2346, %v2346
        %2348 = vadd.xlane.f32.xlu0 %v2347
        %v2349 = vpop.xlane.xlu0 %2348
        %v2350 = vmul.f32 %v2349, %v1668
        %v2351 = vadd.f32 %v2350, 1e-05
        %v2352 = vrsqrt.pop %v2351
        %v2353 = vmul.f32 %v2346, %v2352
        %v2355 = vlaneseq
        %v2356 = vshrl.u32 %v2355, 7
        %v2357 = vsub.s32 0, %v2356
        %v2358 = vrot.slane %v2341, %v2357
        %v2360 = vmul.f32 %v2353, %v2358
        %v2362 = vlaneseq
        %v2363 = vshrl.u32 %v2362, 7
        %v2364 = vsub.s32 0, %v2363
        %v2365 = vrot.slane %v2342, %v2364
        %v2367 = vadd.f32 %v2360, %v2365
        %2368 = vst [vmem:[#allocation2] sm:$0xff] %v2367
        %p2369 = scmp.eq.s32.totalorder %s45, 1
        // Predicated region
        $region105: #{transformer_forward.1} parent=75 // pred_check
          %p2370 = pneg %p2369
        $region106: #{transformer_forward.1} parent=75 // pred_check_branch
          %2372 = sbr.rel (%p2370) target = $region108
        $region107: #{transformer_forward.1} parent=75 // pred_region
          %2373 = vst [vmem:[%s763] sm:$0xff] %v2367
        $region108: #{transformer_forward.1} parent=75 // pred_fallthru
          _
        %s2374 = sand.u32 %s419, 1
        %s2375 = scalar_lea.sflag [#allocation6], %s2374
        %s2376 = sand.u32 %s419, 1
        %s2377 = smul.addr %s2376, 8
        %s2378 = scalar_lea.vmem [#allocation15], %s2377
        // Predicated region
        $region109: #{transformer_forward.1} parent=75 // pred_check
          %p2379 = pneg %p429
        $region110: #{transformer_forward.1} parent=75 // pred_check_branch
          %2381 = sbr.rel (%p2379) target = $region112
        $region111: #{transformer_forward.1} parent=75 // pred_region
          %s2383 = ssub.s32 128, 128
          %2384 = vsyncadd %s2375, %s2383
          %s2385 = smul.addr %s44, 128
          %s2386 = scalar_lea.hbm %s14, %s2385
          %s2388 = sshll.u32 %s2378, 4
          %s2389 = int_to_ptr.vmem [resolvable:$true] %s2388
          %2391 = dma.vmem_to_hbm [thread:$0]  %s2389, 128, %s2386, %s2375
        $region112: #{transformer_forward.1} parent=75 // pred_fallthru
          _
      $region76: #{transformer_forward.1} parent=5 // pred_fallthru
        _
      %p2392 = scmp.le.s32.totalorder 2, %s35
      // Predicated region
      $region113: #{transformer_forward.1} parent=5 // pred_check
        %p2393 = pneg %p2392
      $region114: #{transformer_forward.1} parent=5 // pred_check_branch
        %2395 = sbr.rel (%p2393) target = $region116
      $region115: #{transformer_forward.1} parent=5 // pred_region
        %s2396 = ssub.s32 %s35, 2
        // Predicated region
        $region117: #{transformer_forward.1} parent=115 // pred_check
          %p2397 = pneg %p435
        $region118: #{transformer_forward.1} parent=115 // pred_check_branch
          %2399 = sbr.rel (%p2397) target = $region120
        $region119: #{transformer_forward.1} parent=115 // pred_region
          %s2400 = sand.u32 %s420, 1
          %s2401 = scalar_lea.sflag [#allocation6], %s2400
          %s2402 = sand.u32 %s420, 1
          %s2403 = smul.addr %s2402, 8
          %s2404 = scalar_lea.vmem [#allocation15], %s2403
          %2405 = dma.done %s2401, 128
        $region120: #{transformer_forward.1} parent=115 // pred_fallthru
          _
      $region116: #{transformer_forward.1} parent=5 // pred_fallthru
        _
    $region6: #{transformer_forward.1} parent=1 // loop_footer
      %s39 = sadd.s32 1, %s35
    $region7: #{transformer_forward.1} parent=1 // loop_footer_branch
      %34 = sbr.rel target = $region3
    $region8: #{transformer_forward.1} parent=1 // loop_exit
      _
    %2406 = vsyncpa [#allocation5], 1
    %s2407 = scalar_lea.sflag [#allocation5], 1
    %2408 = vsyncpa %s2407, 1
    %2409 = vsyncpa [#allocation8], 1
    %s2410 = scalar_lea.sflag [#allocation8], 1
    %2411 = vsyncpa %s2410, 1
    %2412 = vsyncpa [#allocation11], 1
    %s2413 = scalar_lea.sflag [#allocation11], 1
    %2414 = vsyncpa %s2413, 1
    %2415 = vsyncpa [#allocation14], 1
    %s2416 = scalar_lea.sflag [#allocation14], 1
    %2417 = vsyncpa %s2416, 1
    %2418 = vsyncpa [#allocation6], 1
    %s2419 = scalar_lea.sflag [#allocation6], 1
    %2420 = vsyncpa %s2419, 1

</llo_original>
